<compile_context>
chip_gen: v6e
topology: v6e:2x2x1
jax: 0.10.0
libtpu: 0.0.40
codegen_flags: <defaults>
</compile_context>

<pallas_src>
import jax
import jax.numpy as jnp
from jax import lax
from jax.experimental import pallas as pl
from jax.experimental.pallas import tpu as pltpu

H_PAD = 128   # LSTM hidden dim 64 zero-padded to one full lane width
M_PAD = 128   # MLP hidden dim 32 zero-padded to one full lane width


# ----------------------------------------------------------------------------
# Pallas kernel: fused input projection + LSTM recurrence + classifier head.
# ----------------------------------------------------------------------------
def _lstm_cls_kernel(x_ref,      # (BB, T*2)         f32  batch-major, (t, feat) flattened
                     proj_ref,   # (3, 4*H_PAD)      f32  rows: W_ih[:,0], W_ih[:,1], b_ih+b_hh
                     whh_ref,    # (H_PAD, 4*H_PAD)  bf16 W_hh^T, per-gate column blocks
                     head_ref,   # (4, H_PAD)        f32  rows: bn_scale, bn_shift, b1, w2
                     w1t_ref,    # (H_PAD, M_PAD)    f32  Linear1 weight^T
                     out_ref,    # (1, BB)           f32  lane-dense output row
                     xp_ref):    # (T, BB, 4*H_PAD)  f32  precomputed input projection
    T = xp_ref.shape[0]
    Hp = H_PAD

    # ---- Hoisted loop-invariant loads (read once, reused by every step).
    w_x0 = proj_ref[0:1, :]                  # (1, 4*Hp)
    w_x1 = proj_ref[1:2, :]                  # (1, 4*Hp)
    bias = proj_ref[2:3, :]                  # (1, 4*Hp)
    whh = whh_ref[...]                       # (Hp, 4*Hp) bf16, VMEM resident

    # ---- Phase 1: input projection for ALL timesteps (carry independent),
    # two broadcast-FMAs per step, parked in VMEM scratch off the h->h chain.
    for t in range(T):
        x0 = x_ref[:, 2 * t:2 * t + 1]                        # (BB, 1)
        x1 = x_ref[:, 2 * t + 1:2 * t + 2]                    # (BB, 1)
        xp_ref[t] = x0 * w_x0 + x1 * w_x1 + bias              # (BB, 4*Hp)

    # ---- Phase 2: LSTM recurrence.  Step t=0 peeled: h0 = c0 = 0, so the
    # recurrent matmul is identically zero and the f*c term vanishes.
    g0 = xp_ref[0]
    c = jax.nn.sigmoid(g0[:, 0 * Hp:1 * Hp]) * jnp.tanh(g0[:, 2 * Hp:3 * Hp])
    h = jax.nn.sigmoid(g0[:, 3 * Hp:4 * Hp]) * jnp.tanh(c)

    def step(t, carry):
        h, c = carry                                          # (BB, Hp) vreg/VMEM resident
        # bf16 MXU operands, f32 accumulate: fewer MXU passes on the serial chain.
        gates = xp_ref[t] + jnp.dot(h.astype(jnp.bfloat16), whh,
                                    preferred_element_type=jnp.float32)
        i_g = jax.nn.sigmoid(gates[:, 0 * Hp:1 * Hp])
        f_g = jax.nn.sigmoid(gates[:, 1 * Hp:2 * Hp])
        g_g = jnp.tanh(gates[:, 2 * Hp:3 * Hp])
        o_g = jax.nn.sigmoid(gates[:, 3 * Hp:4 * Hp])
        c_new = f_g * c + i_g * g_g
        h_new = o_g * jnp.tanh(c_new)
        return (h_new, c_new)

    # T is a small compile-time constant -> fully unrolled (scheduler can
    # overlap MXU push of step t+1 with EUP/VPU tail of step t).
    # For block_b > 64 sweep unroll in {True, 2, False} to avoid vreg spills.
    h, _ = lax.fori_loop(1, T, step, (h, c), unroll=True)

    # ---- Classifier head (eval: BN running stats folded to scale/shift,
    # dropout = identity).
    bn_scale = head_ref[0:1, :]
    bn_shift = head_ref[1:2, :]
    b1 = head_ref[2:3, :]
    w2 = head_ref[3:4, :]
    h_bn = h * bn_scale + bn_shift
    z = jnp.maximum(
        jnp.dot(h_bn, w1t_ref[...], preferred_element_type=jnp.float32) + b1,
        0.0)
    # Final Linear(M, 1) as a trans-B contraction straight into a lane-dense
    # (1, BB) row: unmasked stores, no 128x output write amplification.
    out_ref[...] = lax.dot_general(
        w2, z, dimension_numbers=(((1,), (1,)), ((), ())),
        preferred_element_type=jnp.float32).astype(out_ref.dtype)


# ----------------------------------------------------------------------------
# Wrapper: parameter folding / zero-padding + pallas_call.
# ----------------------------------------------------------------------------
def _pad_gate_vec(v, H):
    """(4H,) -> (4*H_PAD,), each gate block (i|f|g|o) zero-padded to H_PAD lanes."""
    blocks = [jnp.pad(v[k * H:(k + 1) * H], (0, H_PAD - H)) for k in range(4)]
    return jnp.concatenate(blocks).astype(jnp.float32)


def _pad_gate_mat_T(W, H):
    """W: (4H, H) -> W^T zero-padded per gate block -> (H_PAD, 4*H_PAD)."""
    blocks = [jnp.pad(W[k * H:(k + 1) * H, :].T,
                      ((0, H_PAD - H), (0, H_PAD - H))) for k in range(4)]
    return jnp.concatenate(blocks, axis=1)


def _pick_block_b(B):
    """Rows per grid step: whole batch if small; MXU-width per chip otherwise;
    >= 2 'parallel' grid steps on v7x so both TensorCores get work."""
    try:
        kind = jax.devices()[0].device_kind.lower()
    except Exception:  # pragma: no cover - conservative fallback
        kind = ""
    two_tc = "v7" in kind
    cap = 256 if (two_tc or "v6" in kind) else 128   # MXU rows per pass
    if two_tc and B > 8:
        bb = -(-B // 2)
        bb = -(-bb // 8) * 8                         # sublane-aligned
        return min(cap, bb)
    if B <= cap:
        return B
    return cap


@jax.jit
def pair_lstm_classifier(x, params):
    """x: (B, T, 2) float32 -> (B,) float32."""
    (W_ih, W_hh, b_ih, b_hh,
     gamma, beta, r_mean, r_var,
     W1, b1, W2, b2) = params

    B, T, D = x.shape
    H = W_hh.shape[1]
    M = W1.shape[0]
    eps = 1e-5

    # x stays batch-major; (B, T, 2) -> (B, T*2) is a free row-major view
    # (no transpose / extra HBM round trip before the kernel).
    x2d = x.reshape(B, T * D).astype(jnp.float32)

    # LSTM input-projection params packed into ONE small lane-dense block.
    proj = jnp.stack([_pad_gate_vec(W_ih[:, 0], H),
                      _pad_gate_vec(W_ih[:, 1], H),
                      _pad_gate_vec(b_ih + b_hh, H)], axis=0)         # (3, 4*H_PAD)

    # Recurrent weight in bf16 (MXU operand); f32 accumulation in-kernel.
    whh_t = _pad_gate_mat_T(W_hh, H).astype(jnp.bfloat16)             # (H_PAD, 4*H_PAD)

    # BatchNorm1d (eval) folded into scale/shift; packed with b1 and w2 into a
    # single (4, 128) block (one DMA instead of four).  Pad lanes stay zero.
    inv_std = 1.0 / jnp.sqrt(r_var + eps)
    bn_scale = jnp.pad(gamma * inv_std, (0, H_PAD - H))
    bn_shift = jnp.pad(beta - r_mean * gamma * inv_std, (0, H_PAD - H))
    b1_p = jnp.pad(b1, (0, M_PAD - M))
    w2_p = jnp.pad(W2[0], (0, M_PAD - M))
    head = jnp.stack([bn_scale, bn_shift, b1_p, w2_p],
                     axis=0).astype(jnp.float32)                      # (4, H_PAD)

    w1_t = jnp.pad(W1.T, ((0, H_PAD - H), (0, M_PAD - M))).astype(jnp.float32)

    block_b = _pick_block_b(B)
    nblk = -(-B // block_b)

    out = pl.pallas_call(
        _lstm_cls_kernel,
        out_shape=jax.ShapeDtypeStruct((nblk, block_b), jnp.float32),
        grid=(nblk,),
        in_specs=[
            pl.BlockSpec((block_b, T * D), lambda b: (b, 0)),         # x (batch-major)
            pl.BlockSpec((3, 4 * H_PAD), lambda b: (0, 0)),           # W_ih rows + bias
            pl.BlockSpec((H_PAD, 4 * H_PAD), lambda b: (0, 0)),       # W_hh^T (bf16)
            pl.BlockSpec((4, H_PAD), lambda b: (0, 0)),               # bn/b1/w2 pack
            pl.BlockSpec((H_PAD, M_PAD), lambda b: (0, 0)),           # W1^T
        ],
        out_specs=pl.BlockSpec((1, block_b), lambda b: (b, 0)),
        scratch_shapes=[pltpu.VMEM((T, block_b, 4 * H_PAD), jnp.float32)],
        compiler_params=pltpu.CompilerParams(
            dimension_semantics=("parallel",),
            vmem_limit_bytes=32 * 1024 * 1024),
    )(x2d, proj, whh_t, head, w1_t)

    # b2 folded here (no (1,1) VMEM block / DMA in the kernel); squeeze(1).
    return out.reshape(-1)[:B] + b2[0]


# ----------------------------------------------------------------------------
# Pure-JAX reference (f32, unpadded math) for the correctness check.
# ----------------------------------------------------------------------------
def reference(x, params):
    (W_ih, W_hh, b_ih, b_hh,
     gamma, beta, r_mean, r_var,
     W1, b1, W2, b2) = params
    B, T, _ = x.shape
    H = W_hh.shape[1]
    eps = 1e-5

    def cell(carry, x_t):
        h, c = carry
        gates = x_t @ W_ih.T + b_ih + h @ W_hh.T + b_hh
        i = jax.nn.sigmoid(gates[:, 0 * H:1 * H])
        f = jax.nn.sigmoid(gates[:, 1 * H:2 * H])
        g = jnp.tanh(gates[:, 2 * H:3 * H])
        o = jax.nn.sigmoid(gates[:, 3 * H:4 * H])
        c = f * c + i * g
        h = o * jnp.tanh(c)
        return (h, c), None

    h0 = jnp.zeros((B, H), jnp.float32)
    c0 = jnp.zeros((B, H), jnp.float32)
    (h_final, _), _ = lax.scan(cell, (h0, c0), jnp.swapaxes(x, 0, 1))

    h_bn = (h_final - r_mean) / jnp.sqrt(r_var + eps) * gamma + beta
    z = jnp.maximum(h_bn @ W1.T + b1, 0.0)
    out = z @ W2.T + b2
    return out[:, 0]


# ----------------------------------------------------------------------------
# Deterministic parameter init (shapes from PairLSTMClassifier.__init__).
# ----------------------------------------------------------------------------
def init_params(key, in_dim=2, H=64, M=32):
    ks = jax.random.split(key, 12)
    k_lstm = 1.0 / jnp.sqrt(H)

    def u(k, shape, bound):
        return jax.random.uniform(k, shape, jnp.float32, -bound, bound)

    W_ih = u(ks[0], (4 * H, in_dim), k_lstm)
    W_hh = u(ks[1], (4 * H, H), k_lstm)
    b_ih = u(ks[2], (4 * H,), k_lstm)
    b_hh = u(ks[3], (4 * H,), k_lstm)

    gamma = 1.0 + 0.1 * jax.random.normal(ks[4], (H,), jnp.float32)
    beta = 0.1 * jax.random.normal(ks[5], (H,), jnp.float32)
    r_mean = 0.05 * jax.random.normal(ks[6], (H,), jnp.float32)
    r_var = jnp.abs(1.0 + 0.1 * jax.random.normal(ks[7], (H,), jnp.float32))

    k1 = 1.0 / jnp.sqrt(H)
    W1 = u(ks[8], (M, H), k1)
    b1 = u(ks[9], (M,), k1)
    k2 = 1.0 / jnp.sqrt(M)
    W2 = u(ks[10], (1, M), k2)
    b2 = u(ks[11], (1,), k2)

    return (W_ih, W_hh, b_ih, b_hh, gamma, beta, r_mean, r_var, W1, b1, W2, b2)


if __name__ == "__main__":
    key = jax.random.PRNGKey(0)
    k_x, k_p = jax.random.split(key)

    B, T, D = 2, 8, 2          # batch=2, seq=8, pair-feature dim=2
    x = jax.random.normal(k_x, (B, T, D), jnp.float32)
    params = init_params(k_p)

    out = jax.block_until_ready(pair_lstm_classifier(x, params))
    ref = reference(x, params)

    assert out.shape == (B,), f"bad output shape {out.shape}"
    # Tolerance loosened vs a pure-f32 check because the recurrent matmul uses
    # bf16 MXU operands (f32 accumulation); observed drift is ~1e-3.
    assert jnp.allclose(out, ref, atol=2e-2, rtol=2e-2), (out, ref)

    print("KERNEL_OK")
</pallas_src>

<mosaic_0001>
module attributes {stable_mosaic.version = 11 : i64} {
  func.func @_lstm_cls_kernel(%arg0: i32, %arg1: memref<2x16xf32, #tpu.memory_space<vmem>>, %arg2: memref<3x512xf32, #tpu.memory_space<vmem>>, %arg3: memref<128x512xbf16, #tpu.memory_space<vmem>>, %arg4: memref<4x128xf32, #tpu.memory_space<vmem>>, %arg5: memref<128x128xf32, #tpu.memory_space<vmem>>, %arg6: memref<1x2xf32, #tpu.memory_space<vmem>>, %arg7: memref<8x2x512xf32, #tpu.memory_space<vmem>>) attributes {dimension_semantics = [#tpu.dimension_semantics<parallel>], iteration_bounds = array<i64: 1>, scalar_prefetch = 0 : i64, scratch_operands = 1 : i64, tpu.core_type = #tpu.core_type<tc>, window_params = [{transform_indices = @transform_0, window_bounds = array<i64: 2, 16>}, {pipeline_mode = #tpu.pipeline_mode<synchronous>, transform_indices = @transform_1, window_bounds = array<i64: 3, 512>}, {pipeline_mode = #tpu.pipeline_mode<synchronous>, transform_indices = @transform_2, window_bounds = array<i64: 128, 512>}, {pipeline_mode = #tpu.pipeline_mode<synchronous>, transform_indices = @transform_3, window_bounds = array<i64: 4, 128>}, {pipeline_mode = #tpu.pipeline_mode<synchronous>, transform_indices = @transform_4, window_bounds = array<i64: 128, 128>}, {transform_indices = @transform_5, window_bounds = array<i64: 1, 2>}]} {
    %c0 = arith.constant 0 : index
    %c0_0 = arith.constant 0 : index
    %0 = vector.load %arg2[%c0, %c0_0] : memref<3x512xf32, #tpu.memory_space<vmem>>, vector<1x512xf32>
    %c1 = arith.constant 1 : index
    %c0_1 = arith.constant 0 : index
    %1 = vector.load %arg2[%c1, %c0_1] : memref<3x512xf32, #tpu.memory_space<vmem>>, vector<1x512xf32>
    %c2 = arith.constant 2 : index
    %c0_2 = arith.constant 0 : index
    %2 = vector.load %arg2[%c2, %c0_2] : memref<3x512xf32, #tpu.memory_space<vmem>>, vector<1x512xf32>
    %c0_3 = arith.constant 0 : index
    %c0_4 = arith.constant 0 : index
    %3 = vector.load %arg3[%c0_3, %c0_4] : memref<128x512xbf16, #tpu.memory_space<vmem>>, vector<128x512xbf16>
    %c0_5 = arith.constant 0 : index
    %c0_6 = arith.constant 0 : index
    %4 = vector.load %arg1[%c0_5, %c0_6] : memref<2x16xf32, #tpu.memory_space<vmem>>, vector<2x1xf32>
    %c0_7 = arith.constant 0 : index
    %c1_8 = arith.constant 1 : index
    %5 = vector.load %arg1[%c0_7, %c1_8] : memref<2x16xf32, #tpu.memory_space<vmem>>, vector<2x1xf32>
    %6 = vector.broadcast %4 : vector<2x1xf32> to vector<2x512xf32>
    %7 = vector.broadcast %0 : vector<1x512xf32> to vector<2x512xf32>
    %8 = arith.mulf %6, %7 : vector<2x512xf32>
    %9 = vector.broadcast %5 : vector<2x1xf32> to vector<2x512xf32>
    %10 = vector.broadcast %1 : vector<1x512xf32> to vector<2x512xf32>
    %11 = arith.mulf %9, %10 : vector<2x512xf32>
    %12 = arith.addf %8, %11 : vector<2x512xf32>
    %13 = vector.broadcast %2 : vector<1x512xf32> to vector<2x512xf32>
    %14 = arith.addf %12, %13 : vector<2x512xf32>
    %c0_9 = arith.constant 0 : index
    %c0_10 = arith.constant 0 : index
    %c0_11 = arith.constant 0 : index
    %15 = vector.load %arg7[%c0_9, %c0_10, %c0_11] : memref<8x2x512xf32, #tpu.memory_space<vmem>>, vector<1x2x512xf32>
    %16 = vector.shape_cast %15 : vector<1x2x512xf32> to vector<2x512xf32>
    %17 = vector.shape_cast %14 : vector<2x512xf32> to vector<1x2x512xf32>
    tpu.vector_store %arg7[%c0_9, %c0_10, %c0_11], %17 {strides = array<i32>} : memref<8x2x512xf32, #tpu.memory_space<vmem>>, vector<1x2x512xf32>,
    %c0_12 = arith.constant 0 : index
    %c2_13 = arith.constant 2 : index
    %18 = vector.load %arg1[%c0_12, %c2_13] : memref<2x16xf32, #tpu.memory_space<vmem>>, vector<2x1xf32>
    %c0_14 = arith.constant 0 : index
    %c3 = arith.constant 3 : index
    %19 = vector.load %arg1[%c0_14, %c3] : memref<2x16xf32, #tpu.memory_space<vmem>>, vector<2x1xf32>
    %20 = vector.broadcast %18 : vector<2x1xf32> to vector<2x512xf32>
    %21 = vector.broadcast %0 : vector<1x512xf32> to vector<2x512xf32>
    %22 = arith.mulf %20, %21 : vector<2x512xf32>
    %23 = vector.broadcast %19 : vector<2x1xf32> to vector<2x512xf32>
    %24 = vector.broadcast %1 : vector<1x512xf32> to vector<2x512xf32>
    %25 = arith.mulf %23, %24 : vector<2x512xf32>
    %26 = arith.addf %22, %25 : vector<2x512xf32>
    %27 = vector.broadcast %2 : vector<1x512xf32> to vector<2x512xf32>
    %28 = arith.addf %26, %27 : vector<2x512xf32>
    %c1_15 = arith.constant 1 : index
    %c0_16 = arith.constant 0 : index
    %c0_17 = arith.constant 0 : index
    %29 = vector.load %arg7[%c1_15, %c0_16, %c0_17] : memref<8x2x512xf32, #tpu.memory_space<vmem>>, vector<1x2x512xf32>
    %30 = vector.shape_cast %29 : vector<1x2x512xf32> to vector<2x512xf32>
    %31 = vector.shape_cast %28 : vector<2x512xf32> to vector<1x2x512xf32>
    tpu.vector_store %arg7[%c1_15, %c0_16, %c0_17], %31 {strides = array<i32>} : memref<8x2x512xf32, #tpu.memory_space<vmem>>, vector<1x2x512xf32>,
    %c0_18 = arith.constant 0 : index
    %c4 = arith.constant 4 : index
    %32 = vector.load %arg1[%c0_18, %c4] : memref<2x16xf32, #tpu.memory_space<vmem>>, vector<2x1xf32>
    %c0_19 = arith.constant 0 : index
    %c5 = arith.constant 5 : index
    %33 = vector.load %arg1[%c0_19, %c5] : memref<2x16xf32, #tpu.memory_space<vmem>>, vector<2x1xf32>
    %34 = vector.broadcast %32 : vector<2x1xf32> to vector<2x512xf32>
    %35 = vector.broadcast %0 : vector<1x512xf32> to vector<2x512xf32>
    %36 = arith.mulf %34, %35 : vector<2x512xf32>
    %37 = vector.broadcast %33 : vector<2x1xf32> to vector<2x512xf32>
    %38 = vector.broadcast %1 : vector<1x512xf32> to vector<2x512xf32>
    %39 = arith.mulf %37, %38 : vector<2x512xf32>
    %40 = arith.addf %36, %39 : vector<2x512xf32>
    %41 = vector.broadcast %2 : vector<1x512xf32> to vector<2x512xf32>
    %42 = arith.addf %40, %41 : vector<2x512xf32>
    %c2_20 = arith.constant 2 : index
    %c0_21 = arith.constant 0 : index
    %c0_22 = arith.constant 0 : index
    %43 = vector.load %arg7[%c2_20, %c0_21, %c0_22] : memref<8x2x512xf32, #tpu.memory_space<vmem>>, vector<1x2x512xf32>
    %44 = vector.shape_cast %43 : vector<1x2x512xf32> to vector<2x512xf32>
    %45 = vector.shape_cast %42 : vector<2x512xf32> to vector<1x2x512xf32>
    tpu.vector_store %arg7[%c2_20, %c0_21, %c0_22], %45 {strides = array<i32>} : memref<8x2x512xf32, #tpu.memory_space<vmem>>, vector<1x2x512xf32>,
    %c0_23 = arith.constant 0 : index
    %c6 = arith.constant 6 : index
    %46 = vector.load %arg1[%c0_23, %c6] : memref<2x16xf32, #tpu.memory_space<vmem>>, vector<2x1xf32>
    %c0_24 = arith.constant 0 : index
    %c7 = arith.constant 7 : index
    %47 = vector.load %arg1[%c0_24, %c7] : memref<2x16xf32, #tpu.memory_space<vmem>>, vector<2x1xf32>
    %48 = vector.broadcast %46 : vector<2x1xf32> to vector<2x512xf32>
    %49 = vector.broadcast %0 : vector<1x512xf32> to vector<2x512xf32>
    %50 = arith.mulf %48, %49 : vector<2x512xf32>
    %51 = vector.broadcast %47 : vector<2x1xf32> to vector<2x512xf32>
    %52 = vector.broadcast %1 : vector<1x512xf32> to vector<2x512xf32>
    %53 = arith.mulf %51, %52 : vector<2x512xf32>
    %54 = arith.addf %50, %53 : vector<2x512xf32>
    %55 = vector.broadcast %2 : vector<1x512xf32> to vector<2x512xf32>
    %56 = arith.addf %54, %55 : vector<2x512xf32>
    %c3_25 = arith.constant 3 : index
    %c0_26 = arith.constant 0 : index
    %c0_27 = arith.constant 0 : index
    %57 = vector.load %arg7[%c3_25, %c0_26, %c0_27] : memref<8x2x512xf32, #tpu.memory_space<vmem>>, vector<1x2x512xf32>
    %58 = vector.shape_cast %57 : vector<1x2x512xf32> to vector<2x512xf32>
    %59 = vector.shape_cast %56 : vector<2x512xf32> to vector<1x2x512xf32>
    tpu.vector_store %arg7[%c3_25, %c0_26, %c0_27], %59 {strides = array<i32>} : memref<8x2x512xf32, #tpu.memory_space<vmem>>, vector<1x2x512xf32>,
    %c0_28 = arith.constant 0 : index
    %c8 = arith.constant 8 : index
    %60 = vector.load %arg1[%c0_28, %c8] : memref<2x16xf32, #tpu.memory_space<vmem>>, vector<2x1xf32>
    %c0_29 = arith.constant 0 : index
    %c9 = arith.constant 9 : index
    %61 = vector.load %arg1[%c0_29, %c9] : memref<2x16xf32, #tpu.memory_space<vmem>>, vector<2x1xf32>
    %62 = vector.broadcast %60 : vector<2x1xf32> to vector<2x512xf32>
    %63 = vector.broadcast %0 : vector<1x512xf32> to vector<2x512xf32>
    %64 = arith.mulf %62, %63 : vector<2x512xf32>
    %65 = vector.broadcast %61 : vector<2x1xf32> to vector<2x512xf32>
    %66 = vector.broadcast %1 : vector<1x512xf32> to vector<2x512xf32>
    %67 = arith.mulf %65, %66 : vector<2x512xf32>
    %68 = arith.addf %64, %67 : vector<2x512xf32>
    %69 = vector.broadcast %2 : vector<1x512xf32> to vector<2x512xf32>
    %70 = arith.addf %68, %69 : vector<2x512xf32>
    %c4_30 = arith.constant 4 : index
    %c0_31 = arith.constant 0 : index
    %c0_32 = arith.constant 0 : index
    %71 = vector.load %arg7[%c4_30, %c0_31, %c0_32] : memref<8x2x512xf32, #tpu.memory_space<vmem>>, vector<1x2x512xf32>
    %72 = vector.shape_cast %71 : vector<1x2x512xf32> to vector<2x512xf32>
    %73 = vector.shape_cast %70 : vector<2x512xf32> to vector<1x2x512xf32>
    tpu.vector_store %arg7[%c4_30, %c0_31, %c0_32], %73 {strides = array<i32>} : memref<8x2x512xf32, #tpu.memory_space<vmem>>, vector<1x2x512xf32>,
    %c0_33 = arith.constant 0 : index
    %c10 = arith.constant 10 : index
    %74 = vector.load %arg1[%c0_33, %c10] : memref<2x16xf32, #tpu.memory_space<vmem>>, vector<2x1xf32>
    %c0_34 = arith.constant 0 : index
    %c11 = arith.constant 11 : index
    %75 = vector.load %arg1[%c0_34, %c11] : memref<2x16xf32, #tpu.memory_space<vmem>>, vector<2x1xf32>
    %76 = vector.broadcast %74 : vector<2x1xf32> to vector<2x512xf32>
    %77 = vector.broadcast %0 : vector<1x512xf32> to vector<2x512xf32>
    %78 = arith.mulf %76, %77 : vector<2x512xf32>
    %79 = vector.broadcast %75 : vector<2x1xf32> to vector<2x512xf32>
    %80 = vector.broadcast %1 : vector<1x512xf32> to vector<2x512xf32>
    %81 = arith.mulf %79, %80 : vector<2x512xf32>
    %82 = arith.addf %78, %81 : vector<2x512xf32>
    %83 = vector.broadcast %2 : vector<1x512xf32> to vector<2x512xf32>
    %84 = arith.addf %82, %83 : vector<2x512xf32>
    %c5_35 = arith.constant 5 : index
    %c0_36 = arith.constant 0 : index
    %c0_37 = arith.constant 0 : index
    %85 = vector.load %arg7[%c5_35, %c0_36, %c0_37] : memref<8x2x512xf32, #tpu.memory_space<vmem>>, vector<1x2x512xf32>
    %86 = vector.shape_cast %85 : vector<1x2x512xf32> to vector<2x512xf32>
    %87 = vector.shape_cast %84 : vector<2x512xf32> to vector<1x2x512xf32>
    tpu.vector_store %arg7[%c5_35, %c0_36, %c0_37], %87 {strides = array<i32>} : memref<8x2x512xf32, #tpu.memory_space<vmem>>, vector<1x2x512xf32>,
    %c0_38 = arith.constant 0 : index
    %c12 = arith.constant 12 : index
    %88 = vector.load %arg1[%c0_38, %c12] : memref<2x16xf32, #tpu.memory_space<vmem>>, vector<2x1xf32>
    %c0_39 = arith.constant 0 : index
    %c13 = arith.constant 13 : index
    %89 = vector.load %arg1[%c0_39, %c13] : memref<2x16xf32, #tpu.memory_space<vmem>>, vector<2x1xf32>
    %90 = vector.broadcast %88 : vector<2x1xf32> to vector<2x512xf32>
    %91 = vector.broadcast %0 : vector<1x512xf32> to vector<2x512xf32>
    %92 = arith.mulf %90, %91 : vector<2x512xf32>
    %93 = vector.broadcast %89 : vector<2x1xf32> to vector<2x512xf32>
    %94 = vector.broadcast %1 : vector<1x512xf32> to vector<2x512xf32>
    %95 = arith.mulf %93, %94 : vector<2x512xf32>
    %96 = arith.addf %92, %95 : vector<2x512xf32>
    %97 = vector.broadcast %2 : vector<1x512xf32> to vector<2x512xf32>
    %98 = arith.addf %96, %97 : vector<2x512xf32>
    %c6_40 = arith.constant 6 : index
    %c0_41 = arith.constant 0 : index
    %c0_42 = arith.constant 0 : index
    %99 = vector.load %arg7[%c6_40, %c0_41, %c0_42] : memref<8x2x512xf32, #tpu.memory_space<vmem>>, vector<1x2x512xf32>
    %100 = vector.shape_cast %99 : vector<1x2x512xf32> to vector<2x512xf32>
    %101 = vector.shape_cast %98 : vector<2x512xf32> to vector<1x2x512xf32>
    tpu.vector_store %arg7[%c6_40, %c0_41, %c0_42], %101 {strides = array<i32>} : memref<8x2x512xf32, #tpu.memory_space<vmem>>, vector<1x2x512xf32>,
    %c0_43 = arith.constant 0 : index
    %c14 = arith.constant 14 : index
    %102 = vector.load %arg1[%c0_43, %c14] : memref<2x16xf32, #tpu.memory_space<vmem>>, vector<2x1xf32>
    %c0_44 = arith.constant 0 : index
    %c15 = arith.constant 15 : index
    %103 = vector.load %arg1[%c0_44, %c15] : memref<2x16xf32, #tpu.memory_space<vmem>>, vector<2x1xf32>
    %104 = vector.broadcast %102 : vector<2x1xf32> to vector<2x512xf32>
    %105 = vector.broadcast %0 : vector<1x512xf32> to vector<2x512xf32>
    %106 = arith.mulf %104, %105 : vector<2x512xf32>
    %107 = vector.broadcast %103 : vector<2x1xf32> to vector<2x512xf32>
    %108 = vector.broadcast %1 : vector<1x512xf32> to vector<2x512xf32>
    %109 = arith.mulf %107, %108 : vector<2x512xf32>
    %110 = arith.addf %106, %109 : vector<2x512xf32>
    %111 = vector.broadcast %2 : vector<1x512xf32> to vector<2x512xf32>
    %112 = arith.addf %110, %111 : vector<2x512xf32>
    %c7_45 = arith.constant 7 : index
    %c0_46 = arith.constant 0 : index
    %c0_47 = arith.constant 0 : index
    %113 = vector.load %arg7[%c7_45, %c0_46, %c0_47] : memref<8x2x512xf32, #tpu.memory_space<vmem>>, vector<1x2x512xf32>
    %114 = vector.shape_cast %113 : vector<1x2x512xf32> to vector<2x512xf32>
    %115 = vector.shape_cast %112 : vector<2x512xf32> to vector<1x2x512xf32>
    tpu.vector_store %arg7[%c7_45, %c0_46, %c0_47], %115 {strides = array<i32>} : memref<8x2x512xf32, #tpu.memory_space<vmem>>, vector<1x2x512xf32>,
    %c0_48 = arith.constant 0 : index
    %c0_49 = arith.constant 0 : index
    %c0_50 = arith.constant 0 : index
    %116 = vector.load %arg7[%c0_48, %c0_49, %c0_50] : memref<8x2x512xf32, #tpu.memory_space<vmem>>, vector<1x2x512xf32>
    %117 = vector.shape_cast %116 : vector<1x2x512xf32> to vector<2x512xf32>
    %118 = vector.extract_strided_slice %117 {offsets = [0, 0], sizes = [2, 128], strides = [1, 1]} : vector<2x512xf32> to vector<2x128xf32>
    %119 = arith.negf %118 : vector<2x128xf32>
    %120 = math.exp %119 : vector<2x128xf32>
    %cst = arith.constant 1.000000e+00 : f32
    %121 = vector.broadcast %cst : f32 to vector<2x128xf32>
    %122 = arith.addf %121, %120 : vector<2x128xf32>
    %123 = arith.divf %121, %122 : vector<2x128xf32>
    %124 = vector.extract_strided_slice %117 {offsets = [0, 256], sizes = [2, 128], strides = [1, 1]} : vector<2x512xf32> to vector<2x128xf32>
    %125 = math.tanh %124 : vector<2x128xf32>
    %126 = arith.mulf %123, %125 : vector<2x128xf32>
    %127 = vector.extract_strided_slice %117 {offsets = [0, 384], sizes = [2, 128], strides = [1, 1]} : vector<2x512xf32> to vector<2x128xf32>
    %128 = arith.negf %127 : vector<2x128xf32>
    %129 = math.exp %128 : vector<2x128xf32>
    %cst_51 = arith.constant 1.000000e+00 : f32
    %130 = vector.broadcast %cst_51 : f32 to vector<2x128xf32>
    %131 = arith.addf %130, %129 : vector<2x128xf32>
    %132 = arith.divf %130, %131 : vector<2x128xf32>
    %133 = math.tanh %126 : vector<2x128xf32>
    %134 = arith.mulf %132, %133 : vector<2x128xf32>
    %c1_i32 = arith.constant 1 : i32
    %135 = arith.index_cast %c1_i32 : i32 to index
    %c0_52 = arith.constant 0 : index
    %c0_53 = arith.constant 0 : index
    %136 = vector.load %arg7[%135, %c0_52, %c0_53] : memref<8x2x512xf32, #tpu.memory_space<vmem>>, vector<1x2x512xf32>
    %137 = vector.shape_cast %136 : vector<1x2x512xf32> to vector<2x512xf32>
    %138 = arith.truncf %134 : vector<2x128xf32> to vector<2x128xbf16>
    %cst_54 = arith.constant dense<0.000000e+00> : vector<2x512xf32>
    %139 = tpu.matmul %138, %3, %cst_54 {dimension_numbers = #tpu.dot_dimension_numbers<[1], [0], [0], [1], [0, 0, 1, 1], [], []>} : vector<2x128xbf16>, vector<128x512xbf16>, vector<2x512xf32> -> vector<2x512xf32>
    %140 = arith.addf %137, %139 : vector<2x512xf32>
    %141 = vector.extract_strided_slice %140 {offsets = [0, 0], sizes = [2, 128], strides = [1, 1]} : vector<2x512xf32> to vector<2x128xf32>
    %142 = arith.negf %141 : vector<2x128xf32>
    %143 = math.exp %142 : vector<2x128xf32>
    %cst_55 = arith.constant 1.000000e+00 : f32
    %144 = vector.broadcast %cst_55 : f32 to vector<2x128xf32>
    %145 = arith.addf %144, %143 : vector<2x128xf32>
    %146 = arith.divf %144, %145 : vector<2x128xf32>
    %147 = vector.extract_strided_slice %140 {offsets = [0, 128], sizes = [2, 128], strides = [1, 1]} : vector<2x512xf32> to vector<2x128xf32>
    %148 = arith.negf %147 : vector<2x128xf32>
    %149 = math.exp %148 : vector<2x128xf32>
    %cst_56 = arith.constant 1.000000e+00 : f32
    %150 = vector.broadcast %cst_56 : f32 to vector<2x128xf32>
    %151 = arith.addf %150, %149 : vector<2x128xf32>
    %152 = arith.divf %150, %151 : vector<2x128xf32>
    %153 = vector.extract_strided_slice %140 {offsets = [0, 256], sizes = [2, 128], strides = [1, 1]} : vector<2x512xf32> to vector<2x128xf32>
    %154 = math.tanh %153 : vector<2x128xf32>
    %155 = vector.extract_strided_slice %140 {offsets = [0, 384], sizes = [2, 128], strides = [1, 1]} : vector<2x512xf32> to vector<2x128xf32>
    %156 = arith.negf %155 : vector<2x128xf32>
    %157 = math.exp %156 : vector<2x128xf32>
    %cst_57 = arith.constant 1.000000e+00 : f32
    %158 = vector.broadcast %cst_57 : f32 to vector<2x128xf32>
    %159 = arith.addf %158, %157 : vector<2x128xf32>
    %160 = arith.divf %158, %159 : vector<2x128xf32>
    %161 = arith.mulf %152, %126 : vector<2x128xf32>
    %162 = arith.mulf %146, %154 : vector<2x128xf32>
    %163 = arith.addf %161, %162 : vector<2x128xf32>
    %164 = math.tanh %163 : vector<2x128xf32>
    %165 = arith.mulf %160, %164 : vector<2x128xf32>
    %c2_i32 = arith.constant 2 : i32
    %166 = arith.index_cast %c2_i32 : i32 to index
    %c0_58 = arith.constant 0 : index
    %c0_59 = arith.constant 0 : index
    %167 = vector.load %arg7[%166, %c0_58, %c0_59] : memref<8x2x512xf32, #tpu.memory_space<vmem>>, vector<1x2x512xf32>
    %168 = vector.shape_cast %167 : vector<1x2x512xf32> to vector<2x512xf32>
    %169 = arith.truncf %165 : vector<2x128xf32> to vector<2x128xbf16>
    %cst_60 = arith.constant dense<0.000000e+00> : vector<2x512xf32>
    %170 = tpu.matmul %169, %3, %cst_60 {dimension_numbers = #tpu.dot_dimension_numbers<[1], [0], [0], [1], [0, 0, 1, 1], [], []>} : vector<2x128xbf16>, vector<128x512xbf16>, vector<2x512xf32> -> vector<2x512xf32>
    %171 = arith.addf %168, %170 : vector<2x512xf32>
    %172 = vector.extract_strided_slice %171 {offsets = [0, 0], sizes = [2, 128], strides = [1, 1]} : vector<2x512xf32> to vector<2x128xf32>
    %173 = arith.negf %172 : vector<2x128xf32>
    %174 = math.exp %173 : vector<2x128xf32>
    %cst_61 = arith.constant 1.000000e+00 : f32
    %175 = vector.broadcast %cst_61 : f32 to vector<2x128xf32>
    %176 = arith.addf %175, %174 : vector<2x128xf32>
    %177 = arith.divf %175, %176 : vector<2x128xf32>
    %178 = vector.extract_strided_slice %171 {offsets = [0, 128], sizes = [2, 128], strides = [1, 1]} : vector<2x512xf32> to vector<2x128xf32>
    %179 = arith.negf %178 : vector<2x128xf32>
    %180 = math.exp %179 : vector<2x128xf32>
    %cst_62 = arith.constant 1.000000e+00 : f32
    %181 = vector.broadcast %cst_62 : f32 to vector<2x128xf32>
    %182 = arith.addf %181, %180 : vector<2x128xf32>
    %183 = arith.divf %181, %182 : vector<2x128xf32>
    %184 = vector.extract_strided_slice %171 {offsets = [0, 256], sizes = [2, 128], strides = [1, 1]} : vector<2x512xf32> to vector<2x128xf32>
    %185 = math.tanh %184 : vector<2x128xf32>
    %186 = vector.extract_strided_slice %171 {offsets = [0, 384], sizes = [2, 128], strides = [1, 1]} : vector<2x512xf32> to vector<2x128xf32>
    %187 = arith.negf %186 : vector<2x128xf32>
    %188 = math.exp %187 : vector<2x128xf32>
    %cst_63 = arith.constant 1.000000e+00 : f32
    %189 = vector.broadcast %cst_63 : f32 to vector<2x128xf32>
    %190 = arith.addf %189, %188 : vector<2x128xf32>
    %191 = arith.divf %189, %190 : vector<2x128xf32>
    %192 = arith.mulf %183, %163 : vector<2x128xf32>
    %193 = arith.mulf %177, %185 : vector<2x128xf32>
    %194 = arith.addf %192, %193 : vector<2x128xf32>
    %195 = math.tanh %194 : vector<2x128xf32>
    %196 = arith.mulf %191, %195 : vector<2x128xf32>
    %c3_i32 = arith.constant 3 : i32
    %197 = arith.index_cast %c3_i32 : i32 to index
    %c0_64 = arith.constant 0 : index
    %c0_65 = arith.constant 0 : index
    %198 = vector.load %arg7[%197, %c0_64, %c0_65] : memref<8x2x512xf32, #tpu.memory_space<vmem>>, vector<1x2x512xf32>
    %199 = vector.shape_cast %198 : vector<1x2x512xf32> to vector<2x512xf32>
    %200 = arith.truncf %196 : vector<2x128xf32> to vector<2x128xbf16>
    %cst_66 = arith.constant dense<0.000000e+00> : vector<2x512xf32>
    %201 = tpu.matmul %200, %3, %cst_66 {dimension_numbers = #tpu.dot_dimension_numbers<[1], [0], [0], [1], [0, 0, 1, 1], [], []>} : vector<2x128xbf16>, vector<128x512xbf16>, vector<2x512xf32> -> vector<2x512xf32>
    %202 = arith.addf %199, %201 : vector<2x512xf32>
    %203 = vector.extract_strided_slice %202 {offsets = [0, 0], sizes = [2, 128], strides = [1, 1]} : vector<2x512xf32> to vector<2x128xf32>
    %204 = arith.negf %203 : vector<2x128xf32>
    %205 = math.exp %204 : vector<2x128xf32>
    %cst_67 = arith.constant 1.000000e+00 : f32
    %206 = vector.broadcast %cst_67 : f32 to vector<2x128xf32>
    %207 = arith.addf %206, %205 : vector<2x128xf32>
    %208 = arith.divf %206, %207 : vector<2x128xf32>
    %209 = vector.extract_strided_slice %202 {offsets = [0, 128], sizes = [2, 128], strides = [1, 1]} : vector<2x512xf32> to vector<2x128xf32>
    %210 = arith.negf %209 : vector<2x128xf32>
    %211 = math.exp %210 : vector<2x128xf32>
    %cst_68 = arith.constant 1.000000e+00 : f32
    %212 = vector.broadcast %cst_68 : f32 to vector<2x128xf32>
    %213 = arith.addf %212, %211 : vector<2x128xf32>
    %214 = arith.divf %212, %213 : vector<2x128xf32>
    %215 = vector.extract_strided_slice %202 {offsets = [0, 256], sizes = [2, 128], strides = [1, 1]} : vector<2x512xf32> to vector<2x128xf32>
    %216 = math.tanh %215 : vector<2x128xf32>
    %217 = vector.extract_strided_slice %202 {offsets = [0, 384], sizes = [2, 128], strides = [1, 1]} : vector<2x512xf32> to vector<2x128xf32>
    %218 = arith.negf %217 : vector<2x128xf32>
    %219 = math.exp %218 : vector<2x128xf32>
    %cst_69 = arith.constant 1.000000e+00 : f32
    %220 = vector.broadcast %cst_69 : f32 to vector<2x128xf32>
    %221 = arith.addf %220, %219 : vector<2x128xf32>
    %222 = arith.divf %220, %221 : vector<2x128xf32>
    %223 = arith.mulf %214, %194 : vector<2x128xf32>
    %224 = arith.mulf %208, %216 : vector<2x128xf32>
    %225 = arith.addf %223, %224 : vector<2x128xf32>
    %226 = math.tanh %225 : vector<2x128xf32>
    %227 = arith.mulf %222, %226 : vector<2x128xf32>
    %c4_i32 = arith.constant 4 : i32
    %228 = arith.index_cast %c4_i32 : i32 to index
    %c0_70 = arith.constant 0 : index
    %c0_71 = arith.constant 0 : index
    %229 = vector.load %arg7[%228, %c0_70, %c0_71] : memref<8x2x512xf32, #tpu.memory_space<vmem>>, vector<1x2x512xf32>
    %230 = vector.shape_cast %229 : vector<1x2x512xf32> to vector<2x512xf32>
    %231 = arith.truncf %227 : vector<2x128xf32> to vector<2x128xbf16>
    %cst_72 = arith.constant dense<0.000000e+00> : vector<2x512xf32>
    %232 = tpu.matmul %231, %3, %cst_72 {dimension_numbers = #tpu.dot_dimension_numbers<[1], [0], [0], [1], [0, 0, 1, 1], [], []>} : vector<2x128xbf16>, vector<128x512xbf16>, vector<2x512xf32> -> vector<2x512xf32>
    %233 = arith.addf %230, %232 : vector<2x512xf32>
    %234 = vector.extract_strided_slice %233 {offsets = [0, 0], sizes = [2, 128], strides = [1, 1]} : vector<2x512xf32> to vector<2x128xf32>
    %235 = arith.negf %234 : vector<2x128xf32>
    %236 = math.exp %235 : vector<2x128xf32>
    %cst_73 = arith.constant 1.000000e+00 : f32
    %237 = vector.broadcast %cst_73 : f32 to vector<2x128xf32>
    %238 = arith.addf %237, %236 : vector<2x128xf32>
    %239 = arith.divf %237, %238 : vector<2x128xf32>
    %240 = vector.extract_strided_slice %233 {offsets = [0, 128], sizes = [2, 128], strides = [1, 1]} : vector<2x512xf32> to vector<2x128xf32>
    %241 = arith.negf %240 : vector<2x128xf32>
    %242 = math.exp %241 : vector<2x128xf32>
    %cst_74 = arith.constant 1.000000e+00 : f32
    %243 = vector.broadcast %cst_74 : f32 to vector<2x128xf32>
    %244 = arith.addf %243, %242 : vector<2x128xf32>
    %245 = arith.divf %243, %244 : vector<2x128xf32>
    %246 = vector.extract_strided_slice %233 {offsets = [0, 256], sizes = [2, 128], strides = [1, 1]} : vector<2x512xf32> to vector<2x128xf32>
    %247 = math.tanh %246 : vector<2x128xf32>
    %248 = vector.extract_strided_slice %233 {offsets = [0, 384], sizes = [2, 128], strides = [1, 1]} : vector<2x512xf32> to vector<2x128xf32>
    %249 = arith.negf %248 : vector<2x128xf32>
    %250 = math.exp %249 : vector<2x128xf32>
    %cst_75 = arith.constant 1.000000e+00 : f32
    %251 = vector.broadcast %cst_75 : f32 to vector<2x128xf32>
    %252 = arith.addf %251, %250 : vector<2x128xf32>
    %253 = arith.divf %251, %252 : vector<2x128xf32>
    %254 = arith.mulf %245, %225 : vector<2x128xf32>
    %255 = arith.mulf %239, %247 : vector<2x128xf32>
    %256 = arith.addf %254, %255 : vector<2x128xf32>
    %257 = math.tanh %256 : vector<2x128xf32>
    %258 = arith.mulf %253, %257 : vector<2x128xf32>
    %c5_i32 = arith.constant 5 : i32
    %259 = arith.index_cast %c5_i32 : i32 to index
    %c0_76 = arith.constant 0 : index
    %c0_77 = arith.constant 0 : index
    %260 = vector.load %arg7[%259, %c0_76, %c0_77] : memref<8x2x512xf32, #tpu.memory_space<vmem>>, vector<1x2x512xf32>
    %261 = vector.shape_cast %260 : vector<1x2x512xf32> to vector<2x512xf32>
    %262 = arith.truncf %258 : vector<2x128xf32> to vector<2x128xbf16>
    %cst_78 = arith.constant dense<0.000000e+00> : vector<2x512xf32>
    %263 = tpu.matmul %262, %3, %cst_78 {dimension_numbers = #tpu.dot_dimension_numbers<[1], [0], [0], [1], [0, 0, 1, 1], [], []>} : vector<2x128xbf16>, vector<128x512xbf16>, vector<2x512xf32> -> vector<2x512xf32>
    %264 = arith.addf %261, %263 : vector<2x512xf32>
    %265 = vector.extract_strided_slice %264 {offsets = [0, 0], sizes = [2, 128], strides = [1, 1]} : vector<2x512xf32> to vector<2x128xf32>
    %266 = arith.negf %265 : vector<2x128xf32>
    %267 = math.exp %266 : vector<2x128xf32>
    %cst_79 = arith.constant 1.000000e+00 : f32
    %268 = vector.broadcast %cst_79 : f32 to vector<2x128xf32>
    %269 = arith.addf %268, %267 : vector<2x128xf32>
    %270 = arith.divf %268, %269 : vector<2x128xf32>
    %271 = vector.extract_strided_slice %264 {offsets = [0, 128], sizes = [2, 128], strides = [1, 1]} : vector<2x512xf32> to vector<2x128xf32>
    %272 = arith.negf %271 : vector<2x128xf32>
    %273 = math.exp %272 : vector<2x128xf32>
    %cst_80 = arith.constant 1.000000e+00 : f32
    %274 = vector.broadcast %cst_80 : f32 to vector<2x128xf32>
    %275 = arith.addf %274, %273 : vector<2x128xf32>
    %276 = arith.divf %274, %275 : vector<2x128xf32>
    %277 = vector.extract_strided_slice %264 {offsets = [0, 256], sizes = [2, 128], strides = [1, 1]} : vector<2x512xf32> to vector<2x128xf32>
    %278 = math.tanh %277 : vector<2x128xf32>
    %279 = vector.extract_strided_slice %264 {offsets = [0, 384], sizes = [2, 128], strides = [1, 1]} : vector<2x512xf32> to vector<2x128xf32>
    %280 = arith.negf %279 : vector<2x128xf32>
    %281 = math.exp %280 : vector<2x128xf32>
    %cst_81 = arith.constant 1.000000e+00 : f32
    %282 = vector.broadcast %cst_81 : f32 to vector<2x128xf32>
    %283 = arith.addf %282, %281 : vector<2x128xf32>
    %284 = arith.divf %282, %283 : vector<2x128xf32>
    %285 = arith.mulf %276, %256 : vector<2x128xf32>
    %286 = arith.mulf %270, %278 : vector<2x128xf32>
    %287 = arith.addf %285, %286 : vector<2x128xf32>
    %288 = math.tanh %287 : vector<2x128xf32>
    %289 = arith.mulf %284, %288 : vector<2x128xf32>
    %c6_i32 = arith.constant 6 : i32
    %290 = arith.index_cast %c6_i32 : i32 to index
    %c0_82 = arith.constant 0 : index
    %c0_83 = arith.constant 0 : index
    %291 = vector.load %arg7[%290, %c0_82, %c0_83] : memref<8x2x512xf32, #tpu.memory_space<vmem>>, vector<1x2x512xf32>
    %292 = vector.shape_cast %291 : vector<1x2x512xf32> to vector<2x512xf32>
    %293 = arith.truncf %289 : vector<2x128xf32> to vector<2x128xbf16>
    %cst_84 = arith.constant dense<0.000000e+00> : vector<2x512xf32>
    %294 = tpu.matmul %293, %3, %cst_84 {dimension_numbers = #tpu.dot_dimension_numbers<[1], [0], [0], [1], [0, 0, 1, 1], [], []>} : vector<2x128xbf16>, vector<128x512xbf16>, vector<2x512xf32> -> vector<2x512xf32>
    %295 = arith.addf %292, %294 : vector<2x512xf32>
    %296 = vector.extract_strided_slice %295 {offsets = [0, 0], sizes = [2, 128], strides = [1, 1]} : vector<2x512xf32> to vector<2x128xf32>
    %297 = arith.negf %296 : vector<2x128xf32>
    %298 = math.exp %297 : vector<2x128xf32>
    %cst_85 = arith.constant 1.000000e+00 : f32
    %299 = vector.broadcast %cst_85 : f32 to vector<2x128xf32>
    %300 = arith.addf %299, %298 : vector<2x128xf32>
    %301 = arith.divf %299, %300 : vector<2x128xf32>
    %302 = vector.extract_strided_slice %295 {offsets = [0, 128], sizes = [2, 128], strides = [1, 1]} : vector<2x512xf32> to vector<2x128xf32>
    %303 = arith.negf %302 : vector<2x128xf32>
    %304 = math.exp %303 : vector<2x128xf32>
    %cst_86 = arith.constant 1.000000e+00 : f32
    %305 = vector.broadcast %cst_86 : f32 to vector<2x128xf32>
    %306 = arith.addf %305, %304 : vector<2x128xf32>
    %307 = arith.divf %305, %306 : vector<2x128xf32>
    %308 = vector.extract_strided_slice %295 {offsets = [0, 256], sizes = [2, 128], strides = [1, 1]} : vector<2x512xf32> to vector<2x128xf32>
    %309 = math.tanh %308 : vector<2x128xf32>
    %310 = vector.extract_strided_slice %295 {offsets = [0, 384], sizes = [2, 128], strides = [1, 1]} : vector<2x512xf32> to vector<2x128xf32>
    %311 = arith.negf %310 : vector<2x128xf32>
    %312 = math.exp %311 : vector<2x128xf32>
    %cst_87 = arith.constant 1.000000e+00 : f32
    %313 = vector.broadcast %cst_87 : f32 to vector<2x128xf32>
    %314 = arith.addf %313, %312 : vector<2x128xf32>
    %315 = arith.divf %313, %314 : vector<2x128xf32>
    %316 = arith.mulf %307, %287 : vector<2x128xf32>
    %317 = arith.mulf %301, %309 : vector<2x128xf32>
    %318 = arith.addf %316, %317 : vector<2x128xf32>
    %319 = math.tanh %318 : vector<2x128xf32>
    %320 = arith.mulf %315, %319 : vector<2x128xf32>
    %c7_i32 = arith.constant 7 : i32
    %321 = arith.index_cast %c7_i32 : i32 to index
    %c0_88 = arith.constant 0 : index
    %c0_89 = arith.constant 0 : index
    %322 = vector.load %arg7[%321, %c0_88, %c0_89] : memref<8x2x512xf32, #tpu.memory_space<vmem>>, vector<1x2x512xf32>
    %323 = vector.shape_cast %322 : vector<1x2x512xf32> to vector<2x512xf32>
    %324 = arith.truncf %320 : vector<2x128xf32> to vector<2x128xbf16>
    %cst_90 = arith.constant dense<0.000000e+00> : vector<2x512xf32>
    %325 = tpu.matmul %324, %3, %cst_90 {dimension_numbers = #tpu.dot_dimension_numbers<[1], [0], [0], [1], [0, 0, 1, 1], [], []>} : vector<2x128xbf16>, vector<128x512xbf16>, vector<2x512xf32> -> vector<2x512xf32>
    %326 = arith.addf %323, %325 : vector<2x512xf32>
    %327 = vector.extract_strided_slice %326 {offsets = [0, 0], sizes = [2, 128], strides = [1, 1]} : vector<2x512xf32> to vector<2x128xf32>
    %328 = arith.negf %327 : vector<2x128xf32>
    %329 = math.exp %328 : vector<2x128xf32>
    %cst_91 = arith.constant 1.000000e+00 : f32
    %330 = vector.broadcast %cst_91 : f32 to vector<2x128xf32>
    %331 = arith.addf %330, %329 : vector<2x128xf32>
    %332 = arith.divf %330, %331 : vector<2x128xf32>
    %333 = vector.extract_strided_slice %326 {offsets = [0, 128], sizes = [2, 128], strides = [1, 1]} : vector<2x512xf32> to vector<2x128xf32>
    %334 = arith.negf %333 : vector<2x128xf32>
    %335 = math.exp %334 : vector<2x128xf32>
    %cst_92 = arith.constant 1.000000e+00 : f32
    %336 = vector.broadcast %cst_92 : f32 to vector<2x128xf32>
    %337 = arith.addf %336, %335 : vector<2x128xf32>
    %338 = arith.divf %336, %337 : vector<2x128xf32>
    %339 = vector.extract_strided_slice %326 {offsets = [0, 256], sizes = [2, 128], strides = [1, 1]} : vector<2x512xf32> to vector<2x128xf32>
    %340 = math.tanh %339 : vector<2x128xf32>
    %341 = vector.extract_strided_slice %326 {offsets = [0, 384], sizes = [2, 128], strides = [1, 1]} : vector<2x512xf32> to vector<2x128xf32>
    %342 = arith.negf %341 : vector<2x128xf32>
    %343 = math.exp %342 : vector<2x128xf32>
    %cst_93 = arith.constant 1.000000e+00 : f32
    %344 = vector.broadcast %cst_93 : f32 to vector<2x128xf32>
    %345 = arith.addf %344, %343 : vector<2x128xf32>
    %346 = arith.divf %344, %345 : vector<2x128xf32>
    %347 = arith.mulf %338, %318 : vector<2x128xf32>
    %348 = arith.mulf %332, %340 : vector<2x128xf32>
    %349 = arith.addf %347, %348 : vector<2x128xf32>
    %350 = math.tanh %349 : vector<2x128xf32>
    %351 = arith.mulf %346, %350 : vector<2x128xf32>
    %c7_i32_94 = arith.constant 7 : i32
    %c0_95 = arith.constant 0 : index
    %c0_96 = arith.constant 0 : index
    %352 = vector.load %arg4[%c0_95, %c0_96] : memref<4x128xf32, #tpu.memory_space<vmem>>, vector<1x128xf32>
    %c1_97 = arith.constant 1 : index
    %c0_98 = arith.constant 0 : index
    %353 = vector.load %arg4[%c1_97, %c0_98] : memref<4x128xf32, #tpu.memory_space<vmem>>, vector<1x128xf32>
    %c2_99 = arith.constant 2 : index
    %c0_100 = arith.constant 0 : index
    %354 = vector.load %arg4[%c2_99, %c0_100] : memref<4x128xf32, #tpu.memory_space<vmem>>, vector<1x128xf32>
    %c3_101 = arith.constant 3 : index
    %c0_102 = arith.constant 0 : index
    %355 = vector.load %arg4[%c3_101, %c0_102] : memref<4x128xf32, #tpu.memory_space<vmem>>, vector<1x128xf32>
    %356 = vector.broadcast %352 : vector<1x128xf32> to vector<2x128xf32>
    %357 = arith.mulf %351, %356 : vector<2x128xf32>
    %358 = vector.broadcast %353 : vector<1x128xf32> to vector<2x128xf32>
    %359 = arith.addf %357, %358 : vector<2x128xf32>
    %c0_103 = arith.constant 0 : index
    %c0_104 = arith.constant 0 : index
    %360 = vector.load %arg5[%c0_103, %c0_104] : memref<128x128xf32, #tpu.memory_space<vmem>>, vector<128x128xf32>
    %cst_105 = arith.constant dense<0.000000e+00> : vector<2x128xf32>
    %361 = tpu.matmul %359, %360, %cst_105 {dimension_numbers = #tpu.dot_dimension_numbers<[1], [0], [0], [1], [0, 0, 1, 1], [], []>} : vector<2x128xf32>, vector<128x128xf32>, vector<2x128xf32> -> vector<2x128xf32>
    %362 = vector.broadcast %354 : vector<1x128xf32> to vector<2x128xf32>
    %363 = arith.addf %361, %362 : vector<2x128xf32>
    %cst_106 = arith.constant 0.000000e+00 : f32
    %364 = vector.broadcast %cst_106 : f32 to vector<2x128xf32>
    %365 = arith.maximumf %363, %364 : vector<2x128xf32>
    %cst_107 = arith.constant dense<0.000000e+00> : vector<1x2xf32>
    %366 = tpu.matmul %355, %365, %cst_107 {dimension_numbers = #tpu.dot_dimension_numbers<[1], [1], [0], [0], [0, 0, 1, 0], [], []>} : vector<1x128xf32>, vector<2x128xf32>, vector<1x2xf32> -> vector<1x2xf32>
    %c0_108 = arith.constant 0 : index
    %c0_109 = arith.constant 0 : index
    %367 = vector.load %arg6[%c0_108, %c0_109] : memref<1x2xf32, #tpu.memory_space<vmem>>, vector<1x2xf32>
    tpu.vector_store %arg6[%c0_108, %c0_109], %366 {strides = array<i32>} : memref<1x2xf32, #tpu.memory_space<vmem>>, vector<1x2xf32>,
    return
  }
  func.func @transform_0(%arg0: i32) -> (i32, i32) {
    %c0_i32 = arith.constant 0 : i32
    %c0_i32_0 = arith.constant 0 : i32
    return %arg0, %c0_i32 : i32, i32
  }
  func.func @transform_1(%arg0: i32) -> (i32, i32) {
    %c0_i32 = arith.constant 0 : i32
    %c0_i32_0 = arith.constant 0 : i32
    %c0_i32_1 = arith.constant 0 : i32
    return %c0_i32, %c0_i32_0 : i32, i32
  }
  func.func @transform_2(%arg0: i32) -> (i32, i32) {
    %c0_i32 = arith.constant 0 : i32
    %c0_i32_0 = arith.constant 0 : i32
    %c0_i32_1 = arith.constant 0 : i32
    return %c0_i32, %c0_i32_0 : i32, i32
  }
  func.func @transform_3(%arg0: i32) -> (i32, i32) {
    %c0_i32 = arith.constant 0 : i32
    %c0_i32_0 = arith.constant 0 : i32
    %c0_i32_1 = arith.constant 0 : i32
    return %c0_i32, %c0_i32_0 : i32, i32
  }
  func.func @transform_4(%arg0: i32) -> (i32, i32) {
    %c0_i32 = arith.constant 0 : i32
    %c0_i32_0 = arith.constant 0 : i32
    %c0_i32_1 = arith.constant 0 : i32
    return %c0_i32, %c0_i32_0 : i32, i32
  }
  func.func @transform_5(%arg0: i32) -> (i32, i32) {
    %c0_i32 = arith.constant 0 : i32
    %c0_i32_0 = arith.constant 0 : i32
    return %arg0, %c0_i32 : i32, i32
  }
}

</mosaic_0001>

<llo_original>
// kernel: pair_lstm_classifier.1
$region0: #{pair_lstm_classifier.1}
  #allocation0 [shape = 'u32[]', space=smem, size = 0x4, offset = 0x4, fixed_abs, tag = 'smem constant byte address 0x4 - core index']
  #allocation1 [shape = 'u32[144,128]{1,0:T(1,128)}', space=vmem, size = 0x12000, scoped, tag = 'internal scratch']
  #allocation2 [shape = 'f32[8,2,512]{2,1,0:T(2,128)}', space=vmem, size = 0x8000, scoped, tag = 'scratch operand']
  %s0 = inlined_call_operand.vmem [shape: f32[2,16], index: 0, kind: input, shape index: {}]
  %s1 = inlined_call_operand.vmem [shape: f32[3,512], index: 1, kind: input, shape index: {}]
  %s2 = inlined_call_operand.vmem [shape: bf16[128,512], index: 2, kind: input, shape index: {}]
  %s3 = inlined_call_operand.vmem [shape: f32[4,128], index: 3, kind: input, shape index: {}]
  %s4 = inlined_call_operand.vmem [shape: f32[128,128], index: 4, kind: input, shape index: {}]
  %s5 = inlined_call_operand.vmem [shape: f32[1,2], index: 5, kind: output, shape index: {}]
  %s6 = sld [smem:[#allocation0]]
  $region30: #{pair_lstm_classifier.1} parent=0
    _
  %s8 = ssub.s32 1, %s6
  %s9 = scalar_select 0, %s8, %s6
  // Predicated region
  $region2: #{pair_lstm_classifier.1} parent=0 // pred_check
    _
  $region3: #{pair_lstm_classifier.1} parent=0 // pred_check_branch
    %11 = sbr.rel (0) target = $region5
  $region4: #{pair_lstm_classifier.1} parent=0 // pred_region
    _
  $region5: #{pair_lstm_classifier.1} parent=0 // pred_fallthru
    _
  // Predicated region
  $region6: #{pair_lstm_classifier.1} parent=0 // pred_check
    _
  $region7: #{pair_lstm_classifier.1} parent=0 // pred_check_branch
    %13 = sbr.rel (0) target = $region9
  $region8: #{pair_lstm_classifier.1} parent=0 // pred_region
    _
  $region9: #{pair_lstm_classifier.1} parent=0 // pred_fallthru
    _
  // Predicated region
  $region10: #{pair_lstm_classifier.1} parent=0 // pred_check
    _
  $region11: #{pair_lstm_classifier.1} parent=0 // pred_check_branch
    %15 = sbr.rel (0) target = $region13
  $region12: #{pair_lstm_classifier.1} parent=0 // pred_region
    _
  $region13: #{pair_lstm_classifier.1} parent=0 // pred_fallthru
    _
  // Predicated region
  $region14: #{pair_lstm_classifier.1} parent=0 // pred_check
    _
  $region15: #{pair_lstm_classifier.1} parent=0 // pred_check_branch
    %17 = sbr.rel (0) target = $region17
  $region16: #{pair_lstm_classifier.1} parent=0 // pred_region
    _
  $region17: #{pair_lstm_classifier.1} parent=0 // pred_fallthru
    _
  // Predicated region
  $region18: #{pair_lstm_classifier.1} parent=0 // pred_check
    _
  $region19: #{pair_lstm_classifier.1} parent=0 // pred_check_branch
    %19 = sbr.rel (0) target = $region21
  $region20: #{pair_lstm_classifier.1} parent=0 // pred_region
    _
  $region21: #{pair_lstm_classifier.1} parent=0 // pred_fallthru
    _
  %v21 = vld [vmem:[%s1] ss:$4 sm:$0xf]
  %s22 = scalar_lea.vmem %s1, 1
  %v23 = vld [vmem:[%s22] ss:$4 sm:$0xf]
  %s24 = scalar_lea.vmem %s1, 2
  %v25 = vld [vmem:[%s24] ss:$4 sm:$0xf]
  %v26 = vld [vmem:[%s2] sm:$0xff]
  %v27 = vld [vmem:[%s2 + $0x8] sm:$0xff]
  %v28 = vld [vmem:[%s2 + $0x10] sm:$0xff]
  %v29 = vld [vmem:[%s2 + $0x18] sm:$0xff]
  %v30 = vld [vmem:[%s2 + $0x20] sm:$0xff]
  %v31 = vld [vmem:[%s2 + $0x28] sm:$0xff]
  %v32 = vld [vmem:[%s2 + $0x30] sm:$0xff]
  %v33 = vld [vmem:[%s2 + $0x38] sm:$0xff]
  %v34 = vld [vmem:[%s2 + $0x40] sm:$0xff]
  %v35 = vld [vmem:[%s2 + $0x48] sm:$0xff]
  %v36 = vld [vmem:[%s2 + $0x50] sm:$0xff]
  %v37 = vld [vmem:[%s2 + $0x58] sm:$0xff]
  %v38 = vld [vmem:[%s2 + $0x60] sm:$0xff]
  %v39 = vld [vmem:[%s2 + $0x68] sm:$0xff]
  %v40 = vld [vmem:[%s2 + $0x70] sm:$0xff]
  %v41 = vld [vmem:[%s2 + $0x78] sm:$0xff]
  %v42 = vld [vmem:[%s2 + $0x80] sm:$0xff]
  %v43 = vld [vmem:[%s2 + $0x88] sm:$0xff]
  %v44 = vld [vmem:[%s2 + $0x90] sm:$0xff]
  %v45 = vld [vmem:[%s2 + $0x98] sm:$0xff]
  %v46 = vld [vmem:[%s2 + $0xa0] sm:$0xff]
  %v47 = vld [vmem:[%s2 + $0xa8] sm:$0xff]
  %v48 = vld [vmem:[%s2 + $0xb0] sm:$0xff]
  %v49 = vld [vmem:[%s2 + $0xb8] sm:$0xff]
  %v50 = vld [vmem:[%s2 + $0xc0] sm:$0xff]
  %v51 = vld [vmem:[%s2 + $0xc8] sm:$0xff]
  %v52 = vld [vmem:[%s2 + $0xd0] sm:$0xff]
  %v53 = vld [vmem:[%s2 + $0xd8] sm:$0xff]
  %v54 = vld [vmem:[%s2 + $0xe0] sm:$0xff]
  %v55 = vld [vmem:[%s2 + $0xe8] sm:$0xff]
  %v56 = vld [vmem:[%s2 + $0xf0] sm:$0xff]
  %v57 = vld [vmem:[%s2 + $0xf8] sm:$0xff]
  %v58 = vld [vmem:[%s0] sm:$0x3]
  %60 = vset.pattern.permute.xlu0 0
  %61 = vperm.xlu0 %60, %v58
  %v62 = vpop.permute.xlu0 %61
  %v65 = vlaneseq
  %v66 = vshrl.u32 %v65, 7
  %v67 = vsub.s32 0, %v66
  %v68 = vrot.slane %v21, %v67
  %v69 = vlaneseq
  %v70 = vshrl.u32 %v69, 7
  %v71 = vsub.s32 1, %v70
  %v72 = vrot.slane %v21, %v71
  %v73 = vlaneseq
  %v74 = vshrl.u32 %v73, 7
  %v75 = vsub.s32 2, %v74
  %v76 = vrot.slane %v21, %v75
  %v77 = vlaneseq
  %v78 = vshrl.u32 %v77, 7
  %v79 = vsub.s32 3, %v78
  %v80 = vrot.slane %v21, %v79
  %v85 = vmul.f32 %v62, %v68
  %v86 = vmul.f32 %v62, %v72
  %v87 = vmul.f32 %v62, %v76
  %v88 = vmul.f32 %v62, %v80
  %89 = vset.pattern.permute.xlu0 1
  %90 = vperm.xlu0 %89, %v58
  %v91 = vpop.permute.xlu0 %90
  %v94 = vlaneseq
  %v95 = vshrl.u32 %v94, 7
  %v96 = vsub.s32 0, %v95
  %v97 = vrot.slane %v23, %v96
  %v98 = vlaneseq
  %v99 = vshrl.u32 %v98, 7
  %v100 = vsub.s32 1, %v99
  %v101 = vrot.slane %v23, %v100
  %v102 = vlaneseq
  %v103 = vshrl.u32 %v102, 7
  %v104 = vsub.s32 2, %v103
  %v105 = vrot.slane %v23, %v104
  %v106 = vlaneseq
  %v107 = vshrl.u32 %v106, 7
  %v108 = vsub.s32 3, %v107
  %v109 = vrot.slane %v23, %v108
  %v114 = vmul.f32 %v91, %v97
  %v115 = vmul.f32 %v91, %v101
  %v116 = vmul.f32 %v91, %v105
  %v117 = vmul.f32 %v91, %v109
  %v118 = vadd.f32 %v85, %v114
  %v119 = vadd.f32 %v86, %v115
  %v120 = vadd.f32 %v87, %v116
  %v121 = vadd.f32 %v88, %v117
  %v123 = vlaneseq
  %v124 = vshrl.u32 %v123, 7
  %v125 = vsub.s32 0, %v124
  %v126 = vrot.slane %v25, %v125
  %v127 = vlaneseq
  %v128 = vshrl.u32 %v127, 7
  %v129 = vsub.s32 1, %v128
  %v130 = vrot.slane %v25, %v129
  %v131 = vlaneseq
  %v132 = vshrl.u32 %v131, 7
  %v133 = vsub.s32 2, %v132
  %v134 = vrot.slane %v25, %v133
  %v135 = vlaneseq
  %v136 = vshrl.u32 %v135, 7
  %v137 = vsub.s32 3, %v136
  %v138 = vrot.slane %v25, %v137
  %v143 = vadd.f32 %v118, %v126
  %v144 = vadd.f32 %v119, %v130
  %v145 = vadd.f32 %v120, %v134
  %v146 = vadd.f32 %v121, %v138
  %v151 = vcombine.low %v143, %v144
  %v152 = vcombine.low %v145, %v146
  %v154 = vunpack.c.l.s4 1983009808
  %v155 = vunpack.c.0.s8 %v154
  %v156 = vlaneseq
  %v157 = vshrl.u32 %v156, 7
  %v158 = vsub.s32 %v155, %v157
  %v159 = vrot.slane %v151, %v158
  %v161 = vunpack.c.l.s4 1983009808
  %v162 = vunpack.c.0.s8 %v161
  %v163 = vlaneseq
  %v164 = vshrl.u32 %v163, 7
  %v165 = vsub.s32 %v162, %v164
  %v166 = vrot.slane %v152, %v165
  %v167 = vcombine.low %v159, %v166
  %169 = vst [vmem:[#allocation2] sm:$0xff] %v167
  %v170 = vld [vmem:[%s0] sm:$0x3]
  %172 = vset.pattern.permute.xlu0 2
  %173 = vperm.xlu0 %172, %v170
  %v174 = vpop.permute.xlu0 %173
  %v176 = vmul.f32 %v174, %v68
  %v177 = vmul.f32 %v174, %v72
  %v178 = vmul.f32 %v174, %v76
  %v179 = vmul.f32 %v174, %v80
  %180 = vset.pattern.permute.xlu0 3
  %181 = vperm.xlu0 %180, %v170
  %v182 = vpop.permute.xlu0 %181
  %v184 = vmul.f32 %v182, %v97
  %v185 = vmul.f32 %v182, %v101
  %v186 = vmul.f32 %v182, %v105
  %v187 = vmul.f32 %v182, %v109
  %v188 = vadd.f32 %v176, %v184
  %v189 = vadd.f32 %v177, %v185
  %v190 = vadd.f32 %v178, %v186
  %v191 = vadd.f32 %v179, %v187
  %v192 = vadd.f32 %v188, %v126
  %v193 = vadd.f32 %v189, %v130
  %v194 = vadd.f32 %v190, %v134
  %v195 = vadd.f32 %v191, %v138
  %v200 = vcombine.low %v192, %v193
  %v201 = vcombine.low %v194, %v195
  %v203 = vunpack.c.l.s4 1983009808
  %v204 = vunpack.c.0.s8 %v203
  %v205 = vlaneseq
  %v206 = vshrl.u32 %v205, 7
  %v207 = vsub.s32 %v204, %v206
  %v208 = vrot.slane %v200, %v207
  %v210 = vunpack.c.l.s4 1983009808
  %v211 = vunpack.c.0.s8 %v210
  %v212 = vlaneseq
  %v213 = vshrl.u32 %v212, 7
  %v214 = vsub.s32 %v211, %v213
  %v215 = vrot.slane %v201, %v214
  %v216 = vcombine.low %v208, %v215
  %s218 = scalar_lea.vmem [#allocation2], 8
  %219 = vst [vmem:[%s218] sm:$0xff] %v216
  %v220 = vld [vmem:[%s0] sm:$0x3]
  %222 = vset.pattern.permute.xlu0 4
  %223 = vperm.xlu0 %222, %v220
  %v224 = vpop.permute.xlu0 %223
  %v226 = vmul.f32 %v224, %v68
  %v227 = vmul.f32 %v224, %v72
  %v228 = vmul.f32 %v224, %v76
  %v229 = vmul.f32 %v224, %v80
  %230 = vset.pattern.permute.xlu0 5
  %231 = vperm.xlu0 %230, %v220
  %v232 = vpop.permute.xlu0 %231
  %v234 = vmul.f32 %v232, %v97
  %v235 = vmul.f32 %v232, %v101
  %v236 = vmul.f32 %v232, %v105
  %v237 = vmul.f32 %v232, %v109
  %v238 = vadd.f32 %v226, %v234
  %v239 = vadd.f32 %v227, %v235
  %v240 = vadd.f32 %v228, %v236
  %v241 = vadd.f32 %v229, %v237
  %v242 = vadd.f32 %v238, %v126
  %v243 = vadd.f32 %v239, %v130
  %v244 = vadd.f32 %v240, %v134
  %v245 = vadd.f32 %v241, %v138
  %v250 = vcombine.low %v242, %v243
  %v251 = vcombine.low %v244, %v245
  %v253 = vunpack.c.l.s4 1983009808
  %v254 = vunpack.c.0.s8 %v253
  %v255 = vlaneseq
  %v256 = vshrl.u32 %v255, 7
  %v257 = vsub.s32 %v254, %v256
  %v258 = vrot.slane %v250, %v257
  %v260 = vunpack.c.l.s4 1983009808
  %v261 = vunpack.c.0.s8 %v260
  %v262 = vlaneseq
  %v263 = vshrl.u32 %v262, 7
  %v264 = vsub.s32 %v261, %v263
  %v265 = vrot.slane %v251, %v264
  %v266 = vcombine.low %v258, %v265
  %s268 = scalar_lea.vmem [#allocation2], 16
  %269 = vst [vmem:[%s268] sm:$0xff] %v266
  %v270 = vld [vmem:[%s0] sm:$0x3]
  %272 = vset.pattern.permute.xlu0 6
  %273 = vperm.xlu0 %272, %v270
  %v274 = vpop.permute.xlu0 %273
  %v276 = vmul.f32 %v274, %v68
  %v277 = vmul.f32 %v274, %v72
  %v278 = vmul.f32 %v274, %v76
  %v279 = vmul.f32 %v274, %v80
  %280 = vset.pattern.permute.xlu0 7
  %281 = vperm.xlu0 %280, %v270
  %v282 = vpop.permute.xlu0 %281
  %v284 = vmul.f32 %v282, %v97
  %v285 = vmul.f32 %v282, %v101
  %v286 = vmul.f32 %v282, %v105
  %v287 = vmul.f32 %v282, %v109
  %v288 = vadd.f32 %v276, %v284
  %v289 = vadd.f32 %v277, %v285
  %v290 = vadd.f32 %v278, %v286
  %v291 = vadd.f32 %v279, %v287
  %v292 = vadd.f32 %v288, %v126
  %v293 = vadd.f32 %v289, %v130
  %v294 = vadd.f32 %v290, %v134
  %v295 = vadd.f32 %v291, %v138
  %v300 = vcombine.low %v292, %v293
  %v301 = vcombine.low %v294, %v295
  %v303 = vunpack.c.l.s4 1983009808
  %v304 = vunpack.c.0.s8 %v303
  %v305 = vlaneseq
  %v306 = vshrl.u32 %v305, 7
  %v307 = vsub.s32 %v304, %v306
  %v308 = vrot.slane %v300, %v307
  %v310 = vunpack.c.l.s4 1983009808
  %v311 = vunpack.c.0.s8 %v310
  %v312 = vlaneseq
  %v313 = vshrl.u32 %v312, 7
  %v314 = vsub.s32 %v311, %v313
  %v315 = vrot.slane %v301, %v314
  %v316 = vcombine.low %v308, %v315
  %s318 = scalar_lea.vmem [#allocation2], 24
  %319 = vst [vmem:[%s318] sm:$0xff] %v316
  %v320 = vld [vmem:[%s0] sm:$0x3]
  %322 = vset.pattern.permute.xlu0 8
  %323 = vperm.xlu0 %322, %v320
  %v324 = vpop.permute.xlu0 %323
  %v326 = vmul.f32 %v324, %v68
  %v327 = vmul.f32 %v324, %v72
  %v328 = vmul.f32 %v324, %v76
  %v329 = vmul.f32 %v324, %v80
  %330 = vset.pattern.permute.xlu0 9
  %331 = vperm.xlu0 %330, %v320
  %v332 = vpop.permute.xlu0 %331
  %v334 = vmul.f32 %v332, %v97
  %v335 = vmul.f32 %v332, %v101
  %v336 = vmul.f32 %v332, %v105
  %v337 = vmul.f32 %v332, %v109
  %v338 = vadd.f32 %v326, %v334
  %v339 = vadd.f32 %v327, %v335
  %v340 = vadd.f32 %v328, %v336
  %v341 = vadd.f32 %v329, %v337
  %v342 = vadd.f32 %v338, %v126
  %v343 = vadd.f32 %v339, %v130
  %v344 = vadd.f32 %v340, %v134
  %v345 = vadd.f32 %v341, %v138
  %v350 = vcombine.low %v342, %v343
  %v351 = vcombine.low %v344, %v345
  %v353 = vunpack.c.l.s4 1983009808
  %v354 = vunpack.c.0.s8 %v353
  %v355 = vlaneseq
  %v356 = vshrl.u32 %v355, 7
  %v357 = vsub.s32 %v354, %v356
  %v358 = vrot.slane %v350, %v357
  %v360 = vunpack.c.l.s4 1983009808
  %v361 = vunpack.c.0.s8 %v360
  %v362 = vlaneseq
  %v363 = vshrl.u32 %v362, 7
  %v364 = vsub.s32 %v361, %v363
  %v365 = vrot.slane %v351, %v364
  %v366 = vcombine.low %v358, %v365
  %s368 = scalar_lea.vmem [#allocation2], 32
  %369 = vst [vmem:[%s368] sm:$0xff] %v366
  %v370 = vld [vmem:[%s0] sm:$0x3]
  %372 = vset.pattern.permute.xlu0 10
  %373 = vperm.xlu0 %372, %v370
  %v374 = vpop.permute.xlu0 %373
  %v376 = vmul.f32 %v374, %v68
  %v377 = vmul.f32 %v374, %v72
  %v378 = vmul.f32 %v374, %v76
  %v379 = vmul.f32 %v374, %v80
  %380 = vset.pattern.permute.xlu0 11
  %381 = vperm.xlu0 %380, %v370
  %v382 = vpop.permute.xlu0 %381
  %v384 = vmul.f32 %v382, %v97
  %v385 = vmul.f32 %v382, %v101
  %v386 = vmul.f32 %v382, %v105
  %v387 = vmul.f32 %v382, %v109
  %v388 = vadd.f32 %v376, %v384
  %v389 = vadd.f32 %v377, %v385
  %v390 = vadd.f32 %v378, %v386
  %v391 = vadd.f32 %v379, %v387
  %v392 = vadd.f32 %v388, %v126
  %v393 = vadd.f32 %v389, %v130
  %v394 = vadd.f32 %v390, %v134
  %v395 = vadd.f32 %v391, %v138
  %v400 = vcombine.low %v392, %v393
  %v401 = vcombine.low %v394, %v395
  %v403 = vunpack.c.l.s4 1983009808
  %v404 = vunpack.c.0.s8 %v403
  %v405 = vlaneseq
  %v406 = vshrl.u32 %v405, 7
  %v407 = vsub.s32 %v404, %v406
  %v408 = vrot.slane %v400, %v407
  %v410 = vunpack.c.l.s4 1983009808
  %v411 = vunpack.c.0.s8 %v410
  %v412 = vlaneseq
  %v413 = vshrl.u32 %v412, 7
  %v414 = vsub.s32 %v411, %v413
  %v415 = vrot.slane %v401, %v414
  %v416 = vcombine.low %v408, %v415
  %s418 = scalar_lea.vmem [#allocation2], 40
  %419 = vst [vmem:[%s418] sm:$0xff] %v416
  %v420 = vld [vmem:[%s0] sm:$0x3]
  %422 = vset.pattern.permute.xlu0 12
  %423 = vperm.xlu0 %422, %v420
  %v424 = vpop.permute.xlu0 %423
  %v426 = vmul.f32 %v424, %v68
  %v427 = vmul.f32 %v424, %v72
  %v428 = vmul.f32 %v424, %v76
  %v429 = vmul.f32 %v424, %v80
  %430 = vset.pattern.permute.xlu0 13
  %431 = vperm.xlu0 %430, %v420
  %v432 = vpop.permute.xlu0 %431
  %v434 = vmul.f32 %v432, %v97
  %v435 = vmul.f32 %v432, %v101
  %v436 = vmul.f32 %v432, %v105
  %v437 = vmul.f32 %v432, %v109
  %v438 = vadd.f32 %v426, %v434
  %v439 = vadd.f32 %v427, %v435
  %v440 = vadd.f32 %v428, %v436
  %v441 = vadd.f32 %v429, %v437
  %v442 = vadd.f32 %v438, %v126
  %v443 = vadd.f32 %v439, %v130
  %v444 = vadd.f32 %v440, %v134
  %v445 = vadd.f32 %v441, %v138
  %v450 = vcombine.low %v442, %v443
  %v451 = vcombine.low %v444, %v445
  %v453 = vunpack.c.l.s4 1983009808
  %v454 = vunpack.c.0.s8 %v453
  %v455 = vlaneseq
  %v456 = vshrl.u32 %v455, 7
  %v457 = vsub.s32 %v454, %v456
  %v458 = vrot.slane %v450, %v457
  %v460 = vunpack.c.l.s4 1983009808
  %v461 = vunpack.c.0.s8 %v460
  %v462 = vlaneseq
  %v463 = vshrl.u32 %v462, 7
  %v464 = vsub.s32 %v461, %v463
  %v465 = vrot.slane %v451, %v464
  %v466 = vcombine.low %v458, %v465
  %s468 = scalar_lea.vmem [#allocation2], 48
  %469 = vst [vmem:[%s468] sm:$0xff] %v466
  %v470 = vld [vmem:[%s0] sm:$0x3]
  %472 = vset.pattern.permute.xlu0 14
  %473 = vperm.xlu0 %472, %v470
  %v474 = vpop.permute.xlu0 %473
  %v476 = vmul.f32 %v474, %v68
  %v477 = vmul.f32 %v474, %v72
  %v478 = vmul.f32 %v474, %v76
  %v479 = vmul.f32 %v474, %v80
  %480 = vset.pattern.permute.xlu0 15
  %481 = vperm.xlu0 %480, %v470
  %v482 = vpop.permute.xlu0 %481
  %v484 = vmul.f32 %v482, %v97
  %v485 = vmul.f32 %v482, %v101
  %v486 = vmul.f32 %v482, %v105
  %v487 = vmul.f32 %v482, %v109
  %v488 = vadd.f32 %v476, %v484
  %v489 = vadd.f32 %v477, %v485
  %v490 = vadd.f32 %v478, %v486
  %v491 = vadd.f32 %v479, %v487
  %v492 = vadd.f32 %v488, %v126
  %v493 = vadd.f32 %v489, %v130
  %v494 = vadd.f32 %v490, %v134
  %v495 = vadd.f32 %v491, %v138
  %v500 = vcombine.low %v492, %v493
  %v501 = vcombine.low %v494, %v495
  %v503 = vunpack.c.l.s4 1983009808
  %v504 = vunpack.c.0.s8 %v503
  %v505 = vlaneseq
  %v506 = vshrl.u32 %v505, 7
  %v507 = vsub.s32 %v504, %v506
  %v508 = vrot.slane %v500, %v507
  %v510 = vunpack.c.l.s4 1983009808
  %v511 = vunpack.c.0.s8 %v510
  %v512 = vlaneseq
  %v513 = vshrl.u32 %v512, 7
  %v514 = vsub.s32 %v511, %v513
  %v515 = vrot.slane %v501, %v514
  %v516 = vcombine.low %v508, %v515
  %s518 = scalar_lea.vmem [#allocation2], 56
  %519 = vst [vmem:[%s518] sm:$0xff] %v516
  %v520 = vld [vmem:[#allocation2] sm:$0xff]
  %v521 = vxor.u32 %v520, 2147483648
  %v522 = vmul.f32 %v521, 1.442695
  %v523 = vpow.pop %v522
  %v524 = vadd.f32 %v523, 1.0
  %v525 = vrcp.pop %v524
  %v526 = vmul.f32 1.0, %v525
  %v528 = vrot.slane %v520, 4
  %v530 = vtanh.pop %v528
  %v531 = vmul.f32 %v526, %v530
  %v532 = vrot.slane %v520, 6
  %v534 = vxor.u32 %v532, 2147483648
  %v535 = vmul.f32 %v534, 1.442695
  %v536 = vpow.pop %v535
  %v537 = vadd.f32 %v536, 1.0
  %v538 = vrcp.pop %v537
  %v539 = vmul.f32 1.0, %v538
  %v540 = vtanh.pop %v531
  %v541 = vmul.f32 %v539, %v540
  %v542 = vld [vmem:[%s218] sm:$0xff]
  %v543 = vpack.c.bf16 %v541, %v541
  %v576 = vunpack.c.l.b16 %v26
  %v577 = vunpack.c.h.b16 %v26
  %v578 = vunpack.c.l.b16 %v27
  %v579 = vunpack.c.h.b16 %v27
  %v580 = vunpack.c.l.b16 %v28
  %v581 = vunpack.c.h.b16 %v28
  %v582 = vunpack.c.l.b16 %v29
  %v583 = vunpack.c.h.b16 %v29
  %v584 = vunpack.c.l.b16 %v30
  %v585 = vunpack.c.h.b16 %v30
  %v586 = vunpack.c.l.b16 %v31
  %v587 = vunpack.c.h.b16 %v31
  %v588 = vunpack.c.l.b16 %v32
  %v589 = vunpack.c.h.b16 %v32
  %v590 = vunpack.c.l.b16 %v33
  %v591 = vunpack.c.h.b16 %v33
  %v592 = vunpack.c.l.b16 %v34
  %v593 = vunpack.c.h.b16 %v34
  %v594 = vunpack.c.l.b16 %v35
  %v595 = vunpack.c.h.b16 %v35
  %v596 = vunpack.c.l.b16 %v36
  %v597 = vunpack.c.h.b16 %v36
  %v598 = vunpack.c.l.b16 %v37
  %v599 = vunpack.c.h.b16 %v37
  %v600 = vunpack.c.l.b16 %v38
  %v601 = vunpack.c.h.b16 %v38
  %v602 = vunpack.c.l.b16 %v39
  %v603 = vunpack.c.h.b16 %v39
  %v604 = vunpack.c.l.b16 %v40
  %v605 = vunpack.c.h.b16 %v40
  %v606 = vunpack.c.l.b16 %v41
  %v607 = vunpack.c.h.b16 %v41
  %v608 = vunpack.c.l.b16 %v42
  %v609 = vunpack.c.h.b16 %v42
  %v610 = vunpack.c.l.b16 %v43
  %v611 = vunpack.c.h.b16 %v43
  %v612 = vunpack.c.l.b16 %v44
  %v613 = vunpack.c.h.b16 %v44
  %v614 = vunpack.c.l.b16 %v45
  %v615 = vunpack.c.h.b16 %v45
  %v616 = vunpack.c.l.b16 %v46
  %v617 = vunpack.c.h.b16 %v46
  %v618 = vunpack.c.l.b16 %v47
  %v619 = vunpack.c.h.b16 %v47
  %v620 = vunpack.c.l.b16 %v48
  %v621 = vunpack.c.h.b16 %v48
  %v622 = vunpack.c.l.b16 %v49
  %v623 = vunpack.c.h.b16 %v49
  %v624 = vunpack.c.l.b16 %v50
  %v625 = vunpack.c.h.b16 %v50
  %v626 = vunpack.c.l.b16 %v51
  %v627 = vunpack.c.h.b16 %v51
  %v628 = vunpack.c.l.b16 %v52
  %v629 = vunpack.c.h.b16 %v52
  %v630 = vunpack.c.l.b16 %v53
  %v631 = vunpack.c.h.b16 %v53
  %v632 = vunpack.c.l.b16 %v54
  %v633 = vunpack.c.h.b16 %v54
  %v634 = vunpack.c.l.b16 %v55
  %v635 = vunpack.c.h.b16 %v55
  %v636 = vunpack.c.l.b16 %v56
  %v637 = vunpack.c.h.b16 %v56
  %v638 = vunpack.c.l.b16 %v57
  %v639 = vunpack.c.h.b16 %v57
  %v640 = vpack.c.b16 %v580, %v576
  %v641 = vpack.c.b16 %v581, %v577
  %v642 = vpack.c.b16 %v582, %v578
  %v643 = vpack.c.b16 %v583, %v579
  %v644 = vpack.c.b16 %v588, %v584
  %v645 = vpack.c.b16 %v589, %v585
  %v646 = vpack.c.b16 %v590, %v586
  %v647 = vpack.c.b16 %v591, %v587
  %v648 = vpack.c.b16 %v596, %v592
  %v649 = vpack.c.b16 %v597, %v593
  %v650 = vpack.c.b16 %v598, %v594
  %v651 = vpack.c.b16 %v599, %v595
  %v652 = vpack.c.b16 %v604, %v600
  %v653 = vpack.c.b16 %v605, %v601
  %v654 = vpack.c.b16 %v606, %v602
  %v655 = vpack.c.b16 %v607, %v603
  %v656 = vpack.c.b16 %v612, %v608
  %v657 = vpack.c.b16 %v613, %v609
  %v658 = vpack.c.b16 %v614, %v610
  %v659 = vpack.c.b16 %v615, %v611
  %v660 = vpack.c.b16 %v620, %v616
  %v661 = vpack.c.b16 %v621, %v617
  %v662 = vpack.c.b16 %v622, %v618
  %v663 = vpack.c.b16 %v623, %v619
  %v664 = vpack.c.b16 %v628, %v624
  %v665 = vpack.c.b16 %v629, %v625
  %v666 = vpack.c.b16 %v630, %v626
  %v667 = vpack.c.b16 %v631, %v627
  %v668 = vpack.c.b16 %v636, %v632
  %v669 = vpack.c.b16 %v637, %v633
  %v670 = vpack.c.b16 %v638, %v634
  %v671 = vpack.c.b16 %v639, %v635
  %704 = vmatprep.subr.bf16.mxu0 %v669
  %705 = vmatpush1.bf16.msra.mxu0 %v668
  %706 = vmatprep.subr.bf16.mxu0 %v665
  %707 = vmatpush1.bf16.msra.mxu0 %v664
  %708 = vmatprep.subr.bf16.mxu0 %v661
  %709 = vmatpush1.bf16.msra.mxu0 %v660
  %710 = vmatprep.subr.bf16.mxu0 %v657
  %711 = vmatpush1.bf16.msra.mxu0 %v656
  %712 = vmatprep.subr.bf16.mxu0 %v653
  %713 = vmatpush1.bf16.msra.mxu0 %v652
  %714 = vmatprep.subr.bf16.mxu0 %v649
  %715 = vmatpush1.bf16.msra.mxu0 %v648
  %716 = vmatprep.subr.bf16.mxu0 %v645
  %717 = vmatpush1.bf16.msra.mxu0 %v644
  %718 = vmatprep.subr.bf16.mxu0 %v641
  %719 = vmatpush1.bf16.msra.mxu0 %v640
  %720 = vmatprep.subr.bf16.mxu0 0
  %721 = vmatpush2.bf16.msra.mxu0 0
  %722 = vmatprep.subr.bf16.mxu0 0
  %723 = vmatpush2.bf16.msra.mxu0 0
  %724 = vmatprep.subr.bf16.mxu0 0
  %725 = vmatpush2.bf16.msra.mxu0 0
  %726 = vmatprep.subr.bf16.mxu0 0
  %727 = vmatpush2.bf16.msra.mxu0 0
  %728 = vmatprep.subr.bf16.mxu0 0
  %729 = vmatpush2.bf16.msra.mxu0 0
  %730 = vmatprep.subr.bf16.mxu0 0
  %731 = vmatpush2.bf16.msra.mxu0 0
  %732 = vmatprep.subr.bf16.mxu0 0
  %733 = vmatpush2.bf16.msra.mxu0 0
  %734 = vmatprep.subr.bf16.mxu0 0
  %735 = vmatpush2.bf16.msra.mxu0 0
  %736 = vmatprep.mubr.bf16.mxu0 0
  %737 = vmatmul.mubr.bf16.gmra.mxu0 %v543
  %v738 = vpop.f32.mrf.mxu0
  %v739 = vadd.f32 0.0, %v738
  %v740 = vpop.f32.mrf.mxu0
  %v741 = vadd.f32 0.0, %v740
  %v742 = vpop.f32.mrf.mxu0
  %v743 = vpop.f32.mrf.mxu0
  %744 = vdwg.mxu0
  %745 = vmatprep.subr.bf16.mxu0 %v671
  %746 = vmatpush1.bf16.msra.mxu0 %v670
  %747 = vmatprep.subr.bf16.mxu0 %v667
  %748 = vmatpush1.bf16.msra.mxu0 %v666
  %749 = vmatprep.subr.bf16.mxu0 %v663
  %750 = vmatpush1.bf16.msra.mxu0 %v662
  %751 = vmatprep.subr.bf16.mxu0 %v659
  %752 = vmatpush1.bf16.msra.mxu0 %v658
  %753 = vmatprep.subr.bf16.mxu0 %v655
  %754 = vmatpush1.bf16.msra.mxu0 %v654
  %755 = vmatprep.subr.bf16.mxu0 %v651
  %756 = vmatpush1.bf16.msra.mxu0 %v650
  %757 = vmatprep.subr.bf16.mxu0 %v647
  %758 = vmatpush1.bf16.msra.mxu0 %v646
  %759 = vmatprep.subr.bf16.mxu0 %v643
  %760 = vmatpush1.bf16.msra.mxu0 %v642
  %761 = vmatprep.subr.bf16.mxu0 0
  %762 = vmatpush2.bf16.msra.mxu0 0
  %763 = vmatprep.subr.bf16.mxu0 0
  %764 = vmatpush2.bf16.msra.mxu0 0
  %765 = vmatprep.subr.bf16.mxu0 0
  %766 = vmatpush2.bf16.msra.mxu0 0
  %767 = vmatprep.subr.bf16.mxu0 0
  %768 = vmatpush2.bf16.msra.mxu0 0
  %769 = vmatprep.subr.bf16.mxu0 0
  %770 = vmatpush2.bf16.msra.mxu0 0
  %771 = vmatprep.subr.bf16.mxu0 0
  %772 = vmatpush2.bf16.msra.mxu0 0
  %773 = vmatprep.subr.bf16.mxu0 0
  %774 = vmatpush2.bf16.msra.mxu0 0
  %775 = vmatprep.subr.bf16.mxu0 0
  %776 = vmatpush2.bf16.msra.mxu0 0
  %777 = vmatprep.mubr.bf16.mxu0 0
  %778 = vmatmul.mubr.bf16.gmra.mxu0 %v543
  %v779 = vpop.f32.mrf.mxu0
  %v780 = vadd.f32 0.0, %v779
  %v781 = vpop.f32.mrf.mxu0
  %v782 = vadd.f32 0.0, %v781
  %v783 = vpop.f32.mrf.mxu0
  %v784 = vpop.f32.mrf.mxu0
  %785 = vdwg.mxu0
  %v790 = vcombine.low %v739, %v741
  %v791 = vcombine.low %v780, %v782
  %v793 = vunpack.c.l.s4 1983009808
  %v794 = vunpack.c.0.s8 %v793
  %v795 = vlaneseq
  %v796 = vshrl.u32 %v795, 7
  %v797 = vsub.s32 %v794, %v796
  %v798 = vrot.slane %v790, %v797
  %v800 = vunpack.c.l.s4 1983009808
  %v801 = vunpack.c.0.s8 %v800
  %v802 = vlaneseq
  %v803 = vshrl.u32 %v802, 7
  %v804 = vsub.s32 %v801, %v803
  %v805 = vrot.slane %v791, %v804
  %v806 = vcombine.low %v798, %v805
  %v808 = vadd.f32 %v542, %v806
  %v809 = vxor.u32 %v808, 2147483648
  %v810 = vmul.f32 %v809, 1.442695
  %v811 = vpow.pop %v810
  %v812 = vadd.f32 %v811, 1.0
  %v813 = vrcp.pop %v812
  %v814 = vmul.f32 1.0, %v813
  %v816 = vrot.slane %v808, 2
  %v818 = vxor.u32 %v816, 2147483648
  %v819 = vmul.f32 %v818, 1.442695
  %v820 = vpow.pop %v819
  %v821 = vadd.f32 %v820, 1.0
  %v822 = vrcp.pop %v821
  %v823 = vmul.f32 1.0, %v822
  %v824 = vrot.slane %v808, 4
  %v826 = vtanh.pop %v824
  %v827 = vrot.slane %v808, 6
  %v829 = vxor.u32 %v827, 2147483648
  %v830 = vmul.f32 %v829, 1.442695
  %v831 = vpow.pop %v830
  %v832 = vadd.f32 %v831, 1.0
  %v833 = vrcp.pop %v832
  %v834 = vmul.f32 1.0, %v833
  %v835 = vmul.f32 %v823, %v531
  %v836 = vmul.f32 %v814, %v826
  %v837 = vadd.f32 %v835, %v836
  %v838 = vtanh.pop %v837
  %v839 = vmul.f32 %v834, %v838
  %v840 = vld [vmem:[%s268] sm:$0xff]
  %v841 = vpack.c.bf16 %v839, %v839
  %842 = vmatprep.subr.bf16.mxu0 %v669
  %843 = vmatpush1.bf16.msra.mxu0 %v668
  %844 = vmatprep.subr.bf16.mxu0 %v665
  %845 = vmatpush1.bf16.msra.mxu0 %v664
  %846 = vmatprep.subr.bf16.mxu0 %v661
  %847 = vmatpush1.bf16.msra.mxu0 %v660
  %848 = vmatprep.subr.bf16.mxu0 %v657
  %849 = vmatpush1.bf16.msra.mxu0 %v656
  %850 = vmatprep.subr.bf16.mxu0 %v653
  %851 = vmatpush1.bf16.msra.mxu0 %v652
  %852 = vmatprep.subr.bf16.mxu0 %v649
  %853 = vmatpush1.bf16.msra.mxu0 %v648
  %854 = vmatprep.subr.bf16.mxu0 %v645
  %855 = vmatpush1.bf16.msra.mxu0 %v644
  %856 = vmatprep.subr.bf16.mxu0 %v641
  %857 = vmatpush1.bf16.msra.mxu0 %v640
  %858 = vmatprep.subr.bf16.mxu0 0
  %859 = vmatpush2.bf16.msra.mxu0 0
  %860 = vmatprep.subr.bf16.mxu0 0
  %861 = vmatpush2.bf16.msra.mxu0 0
  %862 = vmatprep.subr.bf16.mxu0 0
  %863 = vmatpush2.bf16.msra.mxu0 0
  %864 = vmatprep.subr.bf16.mxu0 0
  %865 = vmatpush2.bf16.msra.mxu0 0
  %866 = vmatprep.subr.bf16.mxu0 0
  %867 = vmatpush2.bf16.msra.mxu0 0
  %868 = vmatprep.subr.bf16.mxu0 0
  %869 = vmatpush2.bf16.msra.mxu0 0
  %870 = vmatprep.subr.bf16.mxu0 0
  %871 = vmatpush2.bf16.msra.mxu0 0
  %872 = vmatprep.subr.bf16.mxu0 0
  %873 = vmatpush2.bf16.msra.mxu0 0
  %874 = vmatprep.mubr.bf16.mxu0 0
  %875 = vmatmul.mubr.bf16.gmra.mxu0 %v841
  %v876 = vpop.f32.mrf.mxu0
  %v877 = vadd.f32 0.0, %v876
  %v878 = vpop.f32.mrf.mxu0
  %v879 = vadd.f32 0.0, %v878
  %v880 = vpop.f32.mrf.mxu0
  %v881 = vpop.f32.mrf.mxu0
  %882 = vdwg.mxu0
  %883 = vmatprep.subr.bf16.mxu0 %v671
  %884 = vmatpush1.bf16.msra.mxu0 %v670
  %885 = vmatprep.subr.bf16.mxu0 %v667
  %886 = vmatpush1.bf16.msra.mxu0 %v666
  %887 = vmatprep.subr.bf16.mxu0 %v663
  %888 = vmatpush1.bf16.msra.mxu0 %v662
  %889 = vmatprep.subr.bf16.mxu0 %v659
  %890 = vmatpush1.bf16.msra.mxu0 %v658
  %891 = vmatprep.subr.bf16.mxu0 %v655
  %892 = vmatpush1.bf16.msra.mxu0 %v654
  %893 = vmatprep.subr.bf16.mxu0 %v651
  %894 = vmatpush1.bf16.msra.mxu0 %v650
  %895 = vmatprep.subr.bf16.mxu0 %v647
  %896 = vmatpush1.bf16.msra.mxu0 %v646
  %897 = vmatprep.subr.bf16.mxu0 %v643
  %898 = vmatpush1.bf16.msra.mxu0 %v642
  %899 = vmatprep.subr.bf16.mxu0 0
  %900 = vmatpush2.bf16.msra.mxu0 0
  %901 = vmatprep.subr.bf16.mxu0 0
  %902 = vmatpush2.bf16.msra.mxu0 0
  %903 = vmatprep.subr.bf16.mxu0 0
  %904 = vmatpush2.bf16.msra.mxu0 0
  %905 = vmatprep.subr.bf16.mxu0 0
  %906 = vmatpush2.bf16.msra.mxu0 0
  %907 = vmatprep.subr.bf16.mxu0 0
  %908 = vmatpush2.bf16.msra.mxu0 0
  %909 = vmatprep.subr.bf16.mxu0 0
  %910 = vmatpush2.bf16.msra.mxu0 0
  %911 = vmatprep.subr.bf16.mxu0 0
  %912 = vmatpush2.bf16.msra.mxu0 0
  %913 = vmatprep.subr.bf16.mxu0 0
  %914 = vmatpush2.bf16.msra.mxu0 0
  %915 = vmatprep.mubr.bf16.mxu0 0
  %916 = vmatmul.mubr.bf16.gmra.mxu0 %v841
  %v917 = vpop.f32.mrf.mxu0
  %v918 = vadd.f32 0.0, %v917
  %v919 = vpop.f32.mrf.mxu0
  %v920 = vadd.f32 0.0, %v919
  %v921 = vpop.f32.mrf.mxu0
  %v922 = vpop.f32.mrf.mxu0
  %923 = vdwg.mxu0
  %v928 = vcombine.low %v877, %v879
  %v929 = vcombine.low %v918, %v920
  %v931 = vunpack.c.l.s4 1983009808
  %v932 = vunpack.c.0.s8 %v931
  %v933 = vlaneseq
  %v934 = vshrl.u32 %v933, 7
  %v935 = vsub.s32 %v932, %v934
  %v936 = vrot.slane %v928, %v935
  %v938 = vunpack.c.l.s4 1983009808
  %v939 = vunpack.c.0.s8 %v938
  %v940 = vlaneseq
  %v941 = vshrl.u32 %v940, 7
  %v942 = vsub.s32 %v939, %v941
  %v943 = vrot.slane %v929, %v942
  %v944 = vcombine.low %v936, %v943
  %v946 = vadd.f32 %v840, %v944
  %v947 = vxor.u32 %v946, 2147483648
  %v948 = vmul.f32 %v947, 1.442695
  %v949 = vpow.pop %v948
  %v950 = vadd.f32 %v949, 1.0
  %v951 = vrcp.pop %v950
  %v952 = vmul.f32 1.0, %v951
  %v954 = vrot.slane %v946, 2
  %v956 = vxor.u32 %v954, 2147483648
  %v957 = vmul.f32 %v956, 1.442695
  %v958 = vpow.pop %v957
  %v959 = vadd.f32 %v958, 1.0
  %v960 = vrcp.pop %v959
  %v961 = vmul.f32 1.0, %v960
  %v962 = vrot.slane %v946, 4
  %v964 = vtanh.pop %v962
  %v965 = vrot.slane %v946, 6
  %v967 = vxor.u32 %v965, 2147483648
  %v968 = vmul.f32 %v967, 1.442695
  %v969 = vpow.pop %v968
  %v970 = vadd.f32 %v969, 1.0
  %v971 = vrcp.pop %v970
  %v972 = vmul.f32 1.0, %v971
  %v973 = vmul.f32 %v961, %v837
  %v974 = vmul.f32 %v952, %v964
  %v975 = vadd.f32 %v973, %v974
  %v976 = vtanh.pop %v975
  %v977 = vmul.f32 %v972, %v976
  %v978 = vld [vmem:[%s318] sm:$0xff]
  %v979 = vpack.c.bf16 %v977, %v977
  %980 = vmatprep.subr.bf16.mxu0 %v669
  %981 = vmatpush1.bf16.msra.mxu0 %v668
  %982 = vmatprep.subr.bf16.mxu0 %v665
  %983 = vmatpush1.bf16.msra.mxu0 %v664
  %984 = vmatprep.subr.bf16.mxu0 %v661
  %985 = vmatpush1.bf16.msra.mxu0 %v660
  %986 = vmatprep.subr.bf16.mxu0 %v657
  %987 = vmatpush1.bf16.msra.mxu0 %v656
  %988 = vmatprep.subr.bf16.mxu0 %v653
  %989 = vmatpush1.bf16.msra.mxu0 %v652
  %990 = vmatprep.subr.bf16.mxu0 %v649
  %991 = vmatpush1.bf16.msra.mxu0 %v648
  %992 = vmatprep.subr.bf16.mxu0 %v645
  %993 = vmatpush1.bf16.msra.mxu0 %v644
  %994 = vmatprep.subr.bf16.mxu0 %v641
  %995 = vmatpush1.bf16.msra.mxu0 %v640
  %996 = vmatprep.subr.bf16.mxu0 0
  %997 = vmatpush2.bf16.msra.mxu0 0
  %998 = vmatprep.subr.bf16.mxu0 0
  %999 = vmatpush2.bf16.msra.mxu0 0
  %1000 = vmatprep.subr.bf16.mxu0 0
  %1001 = vmatpush2.bf16.msra.mxu0 0
  %1002 = vmatprep.subr.bf16.mxu0 0
  %1003 = vmatpush2.bf16.msra.mxu0 0
  %1004 = vmatprep.subr.bf16.mxu0 0
  %1005 = vmatpush2.bf16.msra.mxu0 0
  %1006 = vmatprep.subr.bf16.mxu0 0
  %1007 = vmatpush2.bf16.msra.mxu0 0
  %1008 = vmatprep.subr.bf16.mxu0 0
  %1009 = vmatpush2.bf16.msra.mxu0 0
  %1010 = vmatprep.subr.bf16.mxu0 0
  %1011 = vmatpush2.bf16.msra.mxu0 0
  %1012 = vmatprep.mubr.bf16.mxu0 0
  %1013 = vmatmul.mubr.bf16.gmra.mxu0 %v979
  %v1014 = vpop.f32.mrf.mxu0
  %v1015 = vadd.f32 0.0, %v1014
  %v1016 = vpop.f32.mrf.mxu0
  %v1017 = vadd.f32 0.0, %v1016
  %v1018 = vpop.f32.mrf.mxu0
  %v1019 = vpop.f32.mrf.mxu0
  %1020 = vdwg.mxu0
  %1021 = vmatprep.subr.bf16.mxu0 %v671
  %1022 = vmatpush1.bf16.msra.mxu0 %v670
  %1023 = vmatprep.subr.bf16.mxu0 %v667
  %1024 = vmatpush1.bf16.msra.mxu0 %v666
  %1025 = vmatprep.subr.bf16.mxu0 %v663
  %1026 = vmatpush1.bf16.msra.mxu0 %v662
  %1027 = vmatprep.subr.bf16.mxu0 %v659
  %1028 = vmatpush1.bf16.msra.mxu0 %v658
  %1029 = vmatprep.subr.bf16.mxu0 %v655
  %1030 = vmatpush1.bf16.msra.mxu0 %v654
  %1031 = vmatprep.subr.bf16.mxu0 %v651
  %1032 = vmatpush1.bf16.msra.mxu0 %v650
  %1033 = vmatprep.subr.bf16.mxu0 %v647
  %1034 = vmatpush1.bf16.msra.mxu0 %v646
  %1035 = vmatprep.subr.bf16.mxu0 %v643
  %1036 = vmatpush1.bf16.msra.mxu0 %v642
  %1037 = vmatprep.subr.bf16.mxu0 0
  %1038 = vmatpush2.bf16.msra.mxu0 0
  %1039 = vmatprep.subr.bf16.mxu0 0
  %1040 = vmatpush2.bf16.msra.mxu0 0
  %1041 = vmatprep.subr.bf16.mxu0 0
  %1042 = vmatpush2.bf16.msra.mxu0 0
  %1043 = vmatprep.subr.bf16.mxu0 0
  %1044 = vmatpush2.bf16.msra.mxu0 0
  %1045 = vmatprep.subr.bf16.mxu0 0
  %1046 = vmatpush2.bf16.msra.mxu0 0
  %1047 = vmatprep.subr.bf16.mxu0 0
  %1048 = vmatpush2.bf16.msra.mxu0 0
  %1049 = vmatprep.subr.bf16.mxu0 0
  %1050 = vmatpush2.bf16.msra.mxu0 0
  %1051 = vmatprep.subr.bf16.mxu0 0
  %1052 = vmatpush2.bf16.msra.mxu0 0
  %1053 = vmatprep.mubr.bf16.mxu0 0
  %1054 = vmatmul.mubr.bf16.gmra.mxu0 %v979
  %v1055 = vpop.f32.mrf.mxu0
  %v1056 = vadd.f32 0.0, %v1055
  %v1057 = vpop.f32.mrf.mxu0
  %v1058 = vadd.f32 0.0, %v1057
  %v1059 = vpop.f32.mrf.mxu0
  %v1060 = vpop.f32.mrf.mxu0
  %1061 = vdwg.mxu0
  %v1066 = vcombine.low %v1015, %v1017
  %v1067 = vcombine.low %v1056, %v1058
  %v1069 = vunpack.c.l.s4 1983009808
  %v1070 = vunpack.c.0.s8 %v1069
  %v1071 = vlaneseq
  %v1072 = vshrl.u32 %v1071, 7
  %v1073 = vsub.s32 %v1070, %v1072
  %v1074 = vrot.slane %v1066, %v1073
  %v1076 = vunpack.c.l.s4 1983009808
  %v1077 = vunpack.c.0.s8 %v1076
  %v1078 = vlaneseq
  %v1079 = vshrl.u32 %v1078, 7
  %v1080 = vsub.s32 %v1077, %v1079
  %v1081 = vrot.slane %v1067, %v1080
  %v1082 = vcombine.low %v1074, %v1081
  %v1084 = vadd.f32 %v978, %v1082
  %v1085 = vxor.u32 %v1084, 2147483648
  %v1086 = vmul.f32 %v1085, 1.442695
  %v1087 = vpow.pop %v1086
  %v1088 = vadd.f32 %v1087, 1.0
  %v1089 = vrcp.pop %v1088
  %v1090 = vmul.f32 1.0, %v1089
  %v1092 = vrot.slane %v1084, 2
  %v1094 = vxor.u32 %v1092, 2147483648
  %v1095 = vmul.f32 %v1094, 1.442695
  %v1096 = vpow.pop %v1095
  %v1097 = vadd.f32 %v1096, 1.0
  %v1098 = vrcp.pop %v1097
  %v1099 = vmul.f32 1.0, %v1098
  %v1100 = vrot.slane %v1084, 4
  %v1102 = vtanh.pop %v1100
  %v1103 = vrot.slane %v1084, 6
  %v1105 = vxor.u32 %v1103, 2147483648
  %v1106 = vmul.f32 %v1105, 1.442695
  %v1107 = vpow.pop %v1106
  %v1108 = vadd.f32 %v1107, 1.0
  %v1109 = vrcp.pop %v1108
  %v1110 = vmul.f32 1.0, %v1109
  %v1111 = vmul.f32 %v1099, %v975
  %v1112 = vmul.f32 %v1090, %v1102
  %v1113 = vadd.f32 %v1111, %v1112
  %v1114 = vtanh.pop %v1113
  %v1115 = vmul.f32 %v1110, %v1114
  %v1116 = vld [vmem:[%s368] sm:$0xff]
  %v1117 = vpack.c.bf16 %v1115, %v1115
  %1118 = vmatprep.subr.bf16.mxu0 %v669
  %1119 = vmatpush1.bf16.msra.mxu0 %v668
  %1120 = vmatprep.subr.bf16.mxu0 %v665
  %1121 = vmatpush1.bf16.msra.mxu0 %v664
  %1122 = vmatprep.subr.bf16.mxu0 %v661
  %1123 = vmatpush1.bf16.msra.mxu0 %v660
  %1124 = vmatprep.subr.bf16.mxu0 %v657
  %1125 = vmatpush1.bf16.msra.mxu0 %v656
  %1126 = vmatprep.subr.bf16.mxu0 %v653
  %1127 = vmatpush1.bf16.msra.mxu0 %v652
  %1128 = vmatprep.subr.bf16.mxu0 %v649
  %1129 = vmatpush1.bf16.msra.mxu0 %v648
  %1130 = vmatprep.subr.bf16.mxu0 %v645
  %1131 = vmatpush1.bf16.msra.mxu0 %v644
  %1132 = vmatprep.subr.bf16.mxu0 %v641
  %1133 = vmatpush1.bf16.msra.mxu0 %v640
  %1134 = vmatprep.subr.bf16.mxu0 0
  %1135 = vmatpush2.bf16.msra.mxu0 0
  %1136 = vmatprep.subr.bf16.mxu0 0
  %1137 = vmatpush2.bf16.msra.mxu0 0
  %1138 = vmatprep.subr.bf16.mxu0 0
  %1139 = vmatpush2.bf16.msra.mxu0 0
  %1140 = vmatprep.subr.bf16.mxu0 0
  %1141 = vmatpush2.bf16.msra.mxu0 0
  %1142 = vmatprep.subr.bf16.mxu0 0
  %1143 = vmatpush2.bf16.msra.mxu0 0
  %1144 = vmatprep.subr.bf16.mxu0 0
  %1145 = vmatpush2.bf16.msra.mxu0 0
  %1146 = vmatprep.subr.bf16.mxu0 0
  %1147 = vmatpush2.bf16.msra.mxu0 0
  %1148 = vmatprep.subr.bf16.mxu0 0
  %1149 = vmatpush2.bf16.msra.mxu0 0
  %1150 = vmatprep.mubr.bf16.mxu0 0
  %1151 = vmatmul.mubr.bf16.gmra.mxu0 %v1117
  %v1152 = vpop.f32.mrf.mxu0
  %v1153 = vadd.f32 0.0, %v1152
  %v1154 = vpop.f32.mrf.mxu0
  %v1155 = vadd.f32 0.0, %v1154
  %v1156 = vpop.f32.mrf.mxu0
  %v1157 = vpop.f32.mrf.mxu0
  %1158 = vdwg.mxu0
  %1159 = vmatprep.subr.bf16.mxu0 %v671
  %1160 = vmatpush1.bf16.msra.mxu0 %v670
  %1161 = vmatprep.subr.bf16.mxu0 %v667
  %1162 = vmatpush1.bf16.msra.mxu0 %v666
  %1163 = vmatprep.subr.bf16.mxu0 %v663
  %1164 = vmatpush1.bf16.msra.mxu0 %v662
  %1165 = vmatprep.subr.bf16.mxu0 %v659
  %1166 = vmatpush1.bf16.msra.mxu0 %v658
  %1167 = vmatprep.subr.bf16.mxu0 %v655
  %1168 = vmatpush1.bf16.msra.mxu0 %v654
  %1169 = vmatprep.subr.bf16.mxu0 %v651
  %1170 = vmatpush1.bf16.msra.mxu0 %v650
  %1171 = vmatprep.subr.bf16.mxu0 %v647
  %1172 = vmatpush1.bf16.msra.mxu0 %v646
  %1173 = vmatprep.subr.bf16.mxu0 %v643
  %1174 = vmatpush1.bf16.msra.mxu0 %v642
  %1175 = vmatprep.subr.bf16.mxu0 0
  %1176 = vmatpush2.bf16.msra.mxu0 0
  %1177 = vmatprep.subr.bf16.mxu0 0
  %1178 = vmatpush2.bf16.msra.mxu0 0
  %1179 = vmatprep.subr.bf16.mxu0 0
  %1180 = vmatpush2.bf16.msra.mxu0 0
  %1181 = vmatprep.subr.bf16.mxu0 0
  %1182 = vmatpush2.bf16.msra.mxu0 0
  %1183 = vmatprep.subr.bf16.mxu0 0
  %1184 = vmatpush2.bf16.msra.mxu0 0
  %1185 = vmatprep.subr.bf16.mxu0 0
  %1186 = vmatpush2.bf16.msra.mxu0 0
  %1187 = vmatprep.subr.bf16.mxu0 0
  %1188 = vmatpush2.bf16.msra.mxu0 0
  %1189 = vmatprep.subr.bf16.mxu0 0
  %1190 = vmatpush2.bf16.msra.mxu0 0
  %1191 = vmatprep.mubr.bf16.mxu0 0
  %1192 = vmatmul.mubr.bf16.gmra.mxu0 %v1117
  %v1193 = vpop.f32.mrf.mxu0
  %v1194 = vadd.f32 0.0, %v1193
  %v1195 = vpop.f32.mrf.mxu0
  %v1196 = vadd.f32 0.0, %v1195
  %v1197 = vpop.f32.mrf.mxu0
  %v1198 = vpop.f32.mrf.mxu0
  %1199 = vdwg.mxu0
  %v1204 = vcombine.low %v1153, %v1155
  %v1205 = vcombine.low %v1194, %v1196
  %v1207 = vunpack.c.l.s4 1983009808
  %v1208 = vunpack.c.0.s8 %v1207
  %v1209 = vlaneseq
  %v1210 = vshrl.u32 %v1209, 7
  %v1211 = vsub.s32 %v1208, %v1210
  %v1212 = vrot.slane %v1204, %v1211
  %v1214 = vunpack.c.l.s4 1983009808
  %v1215 = vunpack.c.0.s8 %v1214
  %v1216 = vlaneseq
  %v1217 = vshrl.u32 %v1216, 7
  %v1218 = vsub.s32 %v1215, %v1217
  %v1219 = vrot.slane %v1205, %v1218
  %v1220 = vcombine.low %v1212, %v1219
  %v1222 = vadd.f32 %v1116, %v1220
  %v1223 = vxor.u32 %v1222, 2147483648
  %v1224 = vmul.f32 %v1223, 1.442695
  %v1225 = vpow.pop %v1224
  %v1226 = vadd.f32 %v1225, 1.0
  %v1227 = vrcp.pop %v1226
  %v1228 = vmul.f32 1.0, %v1227
  %v1230 = vrot.slane %v1222, 2
  %v1232 = vxor.u32 %v1230, 2147483648
  %v1233 = vmul.f32 %v1232, 1.442695
  %v1234 = vpow.pop %v1233
  %v1235 = vadd.f32 %v1234, 1.0
  %v1236 = vrcp.pop %v1235
  %v1237 = vmul.f32 1.0, %v1236
  %v1238 = vrot.slane %v1222, 4
  %v1240 = vtanh.pop %v1238
  %v1241 = vrot.slane %v1222, 6
  %v1243 = vxor.u32 %v1241, 2147483648
  %v1244 = vmul.f32 %v1243, 1.442695
  %v1245 = vpow.pop %v1244
  %v1246 = vadd.f32 %v1245, 1.0
  %v1247 = vrcp.pop %v1246
  %v1248 = vmul.f32 1.0, %v1247
  %v1249 = vmul.f32 %v1237, %v1113
  %v1250 = vmul.f32 %v1228, %v1240
  %v1251 = vadd.f32 %v1249, %v1250
  %v1252 = vtanh.pop %v1251
  %v1253 = vmul.f32 %v1248, %v1252
  %v1254 = vld [vmem:[%s418] sm:$0xff]
  %v1255 = vpack.c.bf16 %v1253, %v1253
  %1256 = vmatprep.subr.bf16.mxu0 %v669
  %1257 = vmatpush1.bf16.msra.mxu0 %v668
  %1258 = vmatprep.subr.bf16.mxu0 %v665
  %1259 = vmatpush1.bf16.msra.mxu0 %v664
  %1260 = vmatprep.subr.bf16.mxu0 %v661
  %1261 = vmatpush1.bf16.msra.mxu0 %v660
  %1262 = vmatprep.subr.bf16.mxu0 %v657
  %1263 = vmatpush1.bf16.msra.mxu0 %v656
  %1264 = vmatprep.subr.bf16.mxu0 %v653
  %1265 = vmatpush1.bf16.msra.mxu0 %v652
  %1266 = vmatprep.subr.bf16.mxu0 %v649
  %1267 = vmatpush1.bf16.msra.mxu0 %v648
  %1268 = vmatprep.subr.bf16.mxu0 %v645
  %1269 = vmatpush1.bf16.msra.mxu0 %v644
  %1270 = vmatprep.subr.bf16.mxu0 %v641
  %1271 = vmatpush1.bf16.msra.mxu0 %v640
  %1272 = vmatprep.subr.bf16.mxu0 0
  %1273 = vmatpush2.bf16.msra.mxu0 0
  %1274 = vmatprep.subr.bf16.mxu0 0
  %1275 = vmatpush2.bf16.msra.mxu0 0
  %1276 = vmatprep.subr.bf16.mxu0 0
  %1277 = vmatpush2.bf16.msra.mxu0 0
  %1278 = vmatprep.subr.bf16.mxu0 0
  %1279 = vmatpush2.bf16.msra.mxu0 0
  %1280 = vmatprep.subr.bf16.mxu0 0
  %1281 = vmatpush2.bf16.msra.mxu0 0
  %1282 = vmatprep.subr.bf16.mxu0 0
  %1283 = vmatpush2.bf16.msra.mxu0 0
  %1284 = vmatprep.subr.bf16.mxu0 0
  %1285 = vmatpush2.bf16.msra.mxu0 0
  %1286 = vmatprep.subr.bf16.mxu0 0
  %1287 = vmatpush2.bf16.msra.mxu0 0
  %1288 = vmatprep.mubr.bf16.mxu0 0
  %1289 = vmatmul.mubr.bf16.gmra.mxu0 %v1255
  %v1290 = vpop.f32.mrf.mxu0
  %v1291 = vadd.f32 0.0, %v1290
  %v1292 = vpop.f32.mrf.mxu0
  %v1293 = vadd.f32 0.0, %v1292
  %v1294 = vpop.f32.mrf.mxu0
  %v1295 = vpop.f32.mrf.mxu0
  %1296 = vdwg.mxu0
  %1297 = vmatprep.subr.bf16.mxu0 %v671
  %1298 = vmatpush1.bf16.msra.mxu0 %v670
  %1299 = vmatprep.subr.bf16.mxu0 %v667
  %1300 = vmatpush1.bf16.msra.mxu0 %v666
  %1301 = vmatprep.subr.bf16.mxu0 %v663
  %1302 = vmatpush1.bf16.msra.mxu0 %v662
  %1303 = vmatprep.subr.bf16.mxu0 %v659
  %1304 = vmatpush1.bf16.msra.mxu0 %v658
  %1305 = vmatprep.subr.bf16.mxu0 %v655
  %1306 = vmatpush1.bf16.msra.mxu0 %v654
  %1307 = vmatprep.subr.bf16.mxu0 %v651
  %1308 = vmatpush1.bf16.msra.mxu0 %v650
  %1309 = vmatprep.subr.bf16.mxu0 %v647
  %1310 = vmatpush1.bf16.msra.mxu0 %v646
  %1311 = vmatprep.subr.bf16.mxu0 %v643
  %1312 = vmatpush1.bf16.msra.mxu0 %v642
  %1313 = vmatprep.subr.bf16.mxu0 0
  %1314 = vmatpush2.bf16.msra.mxu0 0
  %1315 = vmatprep.subr.bf16.mxu0 0
  %1316 = vmatpush2.bf16.msra.mxu0 0
  %1317 = vmatprep.subr.bf16.mxu0 0
  %1318 = vmatpush2.bf16.msra.mxu0 0
  %1319 = vmatprep.subr.bf16.mxu0 0
  %1320 = vmatpush2.bf16.msra.mxu0 0
  %1321 = vmatprep.subr.bf16.mxu0 0
  %1322 = vmatpush2.bf16.msra.mxu0 0
  %1323 = vmatprep.subr.bf16.mxu0 0
  %1324 = vmatpush2.bf16.msra.mxu0 0
  %1325 = vmatprep.subr.bf16.mxu0 0
  %1326 = vmatpush2.bf16.msra.mxu0 0
  %1327 = vmatprep.subr.bf16.mxu0 0
  %1328 = vmatpush2.bf16.msra.mxu0 0
  %1329 = vmatprep.mubr.bf16.mxu0 0
  %1330 = vmatmul.mubr.bf16.gmra.mxu0 %v1255
  %v1331 = vpop.f32.mrf.mxu0
  %v1332 = vadd.f32 0.0, %v1331
  %v1333 = vpop.f32.mrf.mxu0
  %v1334 = vadd.f32 0.0, %v1333
  %v1335 = vpop.f32.mrf.mxu0
  %v1336 = vpop.f32.mrf.mxu0
  %1337 = vdwg.mxu0
  %v1342 = vcombine.low %v1291, %v1293
  %v1343 = vcombine.low %v1332, %v1334
  %v1345 = vunpack.c.l.s4 1983009808
  %v1346 = vunpack.c.0.s8 %v1345
  %v1347 = vlaneseq
  %v1348 = vshrl.u32 %v1347, 7
  %v1349 = vsub.s32 %v1346, %v1348
  %v1350 = vrot.slane %v1342, %v1349
  %v1352 = vunpack.c.l.s4 1983009808
  %v1353 = vunpack.c.0.s8 %v1352
  %v1354 = vlaneseq
  %v1355 = vshrl.u32 %v1354, 7
  %v1356 = vsub.s32 %v1353, %v1355
  %v1357 = vrot.slane %v1343, %v1356
  %v1358 = vcombine.low %v1350, %v1357
  %v1360 = vadd.f32 %v1254, %v1358
  %v1361 = vxor.u32 %v1360, 2147483648
  %v1362 = vmul.f32 %v1361, 1.442695
  %v1363 = vpow.pop %v1362
  %v1364 = vadd.f32 %v1363, 1.0
  %v1365 = vrcp.pop %v1364
  %v1366 = vmul.f32 1.0, %v1365
  %v1368 = vrot.slane %v1360, 2
  %v1370 = vxor.u32 %v1368, 2147483648
  %v1371 = vmul.f32 %v1370, 1.442695
  %v1372 = vpow.pop %v1371
  %v1373 = vadd.f32 %v1372, 1.0
  %v1374 = vrcp.pop %v1373
  %v1375 = vmul.f32 1.0, %v1374
  %v1376 = vrot.slane %v1360, 4
  %v1378 = vtanh.pop %v1376
  %v1379 = vrot.slane %v1360, 6
  %v1381 = vxor.u32 %v1379, 2147483648
  %v1382 = vmul.f32 %v1381, 1.442695
  %v1383 = vpow.pop %v1382
  %v1384 = vadd.f32 %v1383, 1.0
  %v1385 = vrcp.pop %v1384
  %v1386 = vmul.f32 1.0, %v1385
  %v1387 = vmul.f32 %v1375, %v1251
  %v1388 = vmul.f32 %v1366, %v1378
  %v1389 = vadd.f32 %v1387, %v1388
  %v1390 = vtanh.pop %v1389
  %v1391 = vmul.f32 %v1386, %v1390
  %v1392 = vld [vmem:[%s468] sm:$0xff]
  %v1393 = vpack.c.bf16 %v1391, %v1391
  %1394 = vmatprep.subr.bf16.mxu0 %v669
  %1395 = vmatpush1.bf16.msra.mxu0 %v668
  %1396 = vmatprep.subr.bf16.mxu0 %v665
  %1397 = vmatpush1.bf16.msra.mxu0 %v664
  %1398 = vmatprep.subr.bf16.mxu0 %v661
  %1399 = vmatpush1.bf16.msra.mxu0 %v660
  %1400 = vmatprep.subr.bf16.mxu0 %v657
  %1401 = vmatpush1.bf16.msra.mxu0 %v656
  %1402 = vmatprep.subr.bf16.mxu0 %v653
  %1403 = vmatpush1.bf16.msra.mxu0 %v652
  %1404 = vmatprep.subr.bf16.mxu0 %v649
  %1405 = vmatpush1.bf16.msra.mxu0 %v648
  %1406 = vmatprep.subr.bf16.mxu0 %v645
  %1407 = vmatpush1.bf16.msra.mxu0 %v644
  %1408 = vmatprep.subr.bf16.mxu0 %v641
  %1409 = vmatpush1.bf16.msra.mxu0 %v640
  %1410 = vmatprep.subr.bf16.mxu0 0
  %1411 = vmatpush2.bf16.msra.mxu0 0
  %1412 = vmatprep.subr.bf16.mxu0 0
  %1413 = vmatpush2.bf16.msra.mxu0 0
  %1414 = vmatprep.subr.bf16.mxu0 0
  %1415 = vmatpush2.bf16.msra.mxu0 0
  %1416 = vmatprep.subr.bf16.mxu0 0
  %1417 = vmatpush2.bf16.msra.mxu0 0
  %1418 = vmatprep.subr.bf16.mxu0 0
  %1419 = vmatpush2.bf16.msra.mxu0 0
  %1420 = vmatprep.subr.bf16.mxu0 0
  %1421 = vmatpush2.bf16.msra.mxu0 0
  %1422 = vmatprep.subr.bf16.mxu0 0
  %1423 = vmatpush2.bf16.msra.mxu0 0
  %1424 = vmatprep.subr.bf16.mxu0 0
  %1425 = vmatpush2.bf16.msra.mxu0 0
  %1426 = vmatprep.mubr.bf16.mxu0 0
  %1427 = vmatmul.mubr.bf16.gmra.mxu0 %v1393
  %v1428 = vpop.f32.mrf.mxu0
  %v1429 = vadd.f32 0.0, %v1428
  %v1430 = vpop.f32.mrf.mxu0
  %v1431 = vadd.f32 0.0, %v1430
  %v1432 = vpop.f32.mrf.mxu0
  %v1433 = vpop.f32.mrf.mxu0
  %1434 = vdwg.mxu0
  %1435 = vmatprep.subr.bf16.mxu0 %v671
  %1436 = vmatpush1.bf16.msra.mxu0 %v670
  %1437 = vmatprep.subr.bf16.mxu0 %v667
  %1438 = vmatpush1.bf16.msra.mxu0 %v666
  %1439 = vmatprep.subr.bf16.mxu0 %v663
  %1440 = vmatpush1.bf16.msra.mxu0 %v662
  %1441 = vmatprep.subr.bf16.mxu0 %v659
  %1442 = vmatpush1.bf16.msra.mxu0 %v658
  %1443 = vmatprep.subr.bf16.mxu0 %v655
  %1444 = vmatpush1.bf16.msra.mxu0 %v654
  %1445 = vmatprep.subr.bf16.mxu0 %v651
  %1446 = vmatpush1.bf16.msra.mxu0 %v650
  %1447 = vmatprep.subr.bf16.mxu0 %v647
  %1448 = vmatpush1.bf16.msra.mxu0 %v646
  %1449 = vmatprep.subr.bf16.mxu0 %v643
  %1450 = vmatpush1.bf16.msra.mxu0 %v642
  %1451 = vmatprep.subr.bf16.mxu0 0
  %1452 = vmatpush2.bf16.msra.mxu0 0
  %1453 = vmatprep.subr.bf16.mxu0 0
  %1454 = vmatpush2.bf16.msra.mxu0 0
  %1455 = vmatprep.subr.bf16.mxu0 0
  %1456 = vmatpush2.bf16.msra.mxu0 0
  %1457 = vmatprep.subr.bf16.mxu0 0
  %1458 = vmatpush2.bf16.msra.mxu0 0
  %1459 = vmatprep.subr.bf16.mxu0 0
  %1460 = vmatpush2.bf16.msra.mxu0 0
  %1461 = vmatprep.subr.bf16.mxu0 0
  %1462 = vmatpush2.bf16.msra.mxu0 0
  %1463 = vmatprep.subr.bf16.mxu0 0
  %1464 = vmatpush2.bf16.msra.mxu0 0
  %1465 = vmatprep.subr.bf16.mxu0 0
  %1466 = vmatpush2.bf16.msra.mxu0 0
  %1467 = vmatprep.mubr.bf16.mxu0 0
  %1468 = vmatmul.mubr.bf16.gmra.mxu0 %v1393
  %v1469 = vpop.f32.mrf.mxu0
  %v1470 = vadd.f32 0.0, %v1469
  %v1471 = vpop.f32.mrf.mxu0
  %v1472 = vadd.f32 0.0, %v1471
  %v1473 = vpop.f32.mrf.mxu0
  %v1474 = vpop.f32.mrf.mxu0
  %1475 = vdwg.mxu0
  %v1480 = vcombine.low %v1429, %v1431
  %v1481 = vcombine.low %v1470, %v1472
  %v1483 = vunpack.c.l.s4 1983009808
  %v1484 = vunpack.c.0.s8 %v1483
  %v1485 = vlaneseq
  %v1486 = vshrl.u32 %v1485, 7
  %v1487 = vsub.s32 %v1484, %v1486
  %v1488 = vrot.slane %v1480, %v1487
  %v1490 = vunpack.c.l.s4 1983009808
  %v1491 = vunpack.c.0.s8 %v1490
  %v1492 = vlaneseq
  %v1493 = vshrl.u32 %v1492, 7
  %v1494 = vsub.s32 %v1491, %v1493
  %v1495 = vrot.slane %v1481, %v1494
  %v1496 = vcombine.low %v1488, %v1495
  %v1498 = vadd.f32 %v1392, %v1496
  %v1499 = vxor.u32 %v1498, 2147483648
  %v1500 = vmul.f32 %v1499, 1.442695
  %v1501 = vpow.pop %v1500
  %v1502 = vadd.f32 %v1501, 1.0
  %v1503 = vrcp.pop %v1502
  %v1504 = vmul.f32 1.0, %v1503
  %v1506 = vrot.slane %v1498, 2
  %v1508 = vxor.u32 %v1506, 2147483648
  %v1509 = vmul.f32 %v1508, 1.442695
  %v1510 = vpow.pop %v1509
  %v1511 = vadd.f32 %v1510, 1.0
  %v1512 = vrcp.pop %v1511
  %v1513 = vmul.f32 1.0, %v1512
  %v1514 = vrot.slane %v1498, 4
  %v1516 = vtanh.pop %v1514
  %v1517 = vrot.slane %v1498, 6
  %v1519 = vxor.u32 %v1517, 2147483648
  %v1520 = vmul.f32 %v1519, 1.442695
  %v1521 = vpow.pop %v1520
  %v1522 = vadd.f32 %v1521, 1.0
  %v1523 = vrcp.pop %v1522
  %v1524 = vmul.f32 1.0, %v1523
  %v1525 = vmul.f32 %v1513, %v1389
  %v1526 = vmul.f32 %v1504, %v1516
  %v1527 = vadd.f32 %v1525, %v1526
  %v1528 = vtanh.pop %v1527
  %v1529 = vmul.f32 %v1524, %v1528
  %v1530 = vld [vmem:[%s518] sm:$0xff]
  %v1531 = vpack.c.bf16 %v1529, %v1529
  %1532 = vmatprep.subr.bf16.mxu0 %v669
  %1533 = vmatpush1.bf16.msra.mxu0 %v668
  %1534 = vmatprep.subr.bf16.mxu0 %v665
  %1535 = vmatpush1.bf16.msra.mxu0 %v664
  %1536 = vmatprep.subr.bf16.mxu0 %v661
  %1537 = vmatpush1.bf16.msra.mxu0 %v660
  %1538 = vmatprep.subr.bf16.mxu0 %v657
  %1539 = vmatpush1.bf16.msra.mxu0 %v656
  %1540 = vmatprep.subr.bf16.mxu0 %v653
  %1541 = vmatpush1.bf16.msra.mxu0 %v652
  %1542 = vmatprep.subr.bf16.mxu0 %v649
  %1543 = vmatpush1.bf16.msra.mxu0 %v648
  %1544 = vmatprep.subr.bf16.mxu0 %v645
  %1545 = vmatpush1.bf16.msra.mxu0 %v644
  %1546 = vmatprep.subr.bf16.mxu0 %v641
  %1547 = vmatpush1.bf16.msra.mxu0 %v640
  %1548 = vmatprep.subr.bf16.mxu0 0
  %1549 = vmatpush2.bf16.msra.mxu0 0
  %1550 = vmatprep.subr.bf16.mxu0 0
  %1551 = vmatpush2.bf16.msra.mxu0 0
  %1552 = vmatprep.subr.bf16.mxu0 0
  %1553 = vmatpush2.bf16.msra.mxu0 0
  %1554 = vmatprep.subr.bf16.mxu0 0
  %1555 = vmatpush2.bf16.msra.mxu0 0
  %1556 = vmatprep.subr.bf16.mxu0 0
  %1557 = vmatpush2.bf16.msra.mxu0 0
  %1558 = vmatprep.subr.bf16.mxu0 0
  %1559 = vmatpush2.bf16.msra.mxu0 0
  %1560 = vmatprep.subr.bf16.mxu0 0
  %1561 = vmatpush2.bf16.msra.mxu0 0
  %1562 = vmatprep.subr.bf16.mxu0 0
  %1563 = vmatpush2.bf16.msra.mxu0 0
  %1564 = vmatprep.mubr.bf16.mxu0 0
  %1565 = vmatmul.mubr.bf16.gmra.mxu0 %v1531
  %v1566 = vpop.f32.mrf.mxu0
  %v1567 = vadd.f32 0.0, %v1566
  %v1568 = vpop.f32.mrf.mxu0
  %v1569 = vadd.f32 0.0, %v1568
  %v1570 = vpop.f32.mrf.mxu0
  %v1571 = vpop.f32.mrf.mxu0
  %1572 = vdwg.mxu0
  %1573 = vmatprep.subr.bf16.mxu0 %v671
  %1574 = vmatpush1.bf16.msra.mxu0 %v670
  %1575 = vmatprep.subr.bf16.mxu0 %v667
  %1576 = vmatpush1.bf16.msra.mxu0 %v666
  %1577 = vmatprep.subr.bf16.mxu0 %v663
  %1578 = vmatpush1.bf16.msra.mxu0 %v662
  %1579 = vmatprep.subr.bf16.mxu0 %v659
  %1580 = vmatpush1.bf16.msra.mxu0 %v658
  %1581 = vmatprep.subr.bf16.mxu0 %v655
  %1582 = vmatpush1.bf16.msra.mxu0 %v654
  %1583 = vmatprep.subr.bf16.mxu0 %v651
  %1584 = vmatpush1.bf16.msra.mxu0 %v650
  %1585 = vmatprep.subr.bf16.mxu0 %v647
  %1586 = vmatpush1.bf16.msra.mxu0 %v646
  %1587 = vmatprep.subr.bf16.mxu0 %v643
  %1588 = vmatpush1.bf16.msra.mxu0 %v642
  %1589 = vmatprep.subr.bf16.mxu0 0
  %1590 = vmatpush2.bf16.msra.mxu0 0
  %1591 = vmatprep.subr.bf16.mxu0 0
  %1592 = vmatpush2.bf16.msra.mxu0 0
  %1593 = vmatprep.subr.bf16.mxu0 0
  %1594 = vmatpush2.bf16.msra.mxu0 0
  %1595 = vmatprep.subr.bf16.mxu0 0
  %1596 = vmatpush2.bf16.msra.mxu0 0
  %1597 = vmatprep.subr.bf16.mxu0 0
  %1598 = vmatpush2.bf16.msra.mxu0 0
  %1599 = vmatprep.subr.bf16.mxu0 0
  %1600 = vmatpush2.bf16.msra.mxu0 0
  %1601 = vmatprep.subr.bf16.mxu0 0
  %1602 = vmatpush2.bf16.msra.mxu0 0
  %1603 = vmatprep.subr.bf16.mxu0 0
  %1604 = vmatpush2.bf16.msra.mxu0 0
  %1605 = vmatprep.mubr.bf16.mxu0 0
  %1606 = vmatmul.mubr.bf16.gmra.mxu0 %v1531
  %v1607 = vpop.f32.mrf.mxu0
  %v1608 = vadd.f32 0.0, %v1607
  %v1609 = vpop.f32.mrf.mxu0
  %v1610 = vadd.f32 0.0, %v1609
  %v1611 = vpop.f32.mrf.mxu0
  %v1612 = vpop.f32.mrf.mxu0
  %1613 = vdwg.mxu0
  %v1618 = vcombine.low %v1567, %v1569
  %v1619 = vcombine.low %v1608, %v1610
  %v1621 = vunpack.c.l.s4 1983009808
  %v1622 = vunpack.c.0.s8 %v1621
  %v1623 = vlaneseq
  %v1624 = vshrl.u32 %v1623, 7
  %v1625 = vsub.s32 %v1622, %v1624
  %v1626 = vrot.slane %v1618, %v1625
  %v1628 = vunpack.c.l.s4 1983009808
  %v1629 = vunpack.c.0.s8 %v1628
  %v1630 = vlaneseq
  %v1631 = vshrl.u32 %v1630, 7
  %v1632 = vsub.s32 %v1629, %v1631
  %v1633 = vrot.slane %v1619, %v1632
  %v1634 = vcombine.low %v1626, %v1633
  %v1636 = vadd.f32 %v1530, %v1634
  %v1637 = vxor.u32 %v1636, 2147483648
  %v1638 = vmul.f32 %v1637, 1.442695
  %v1639 = vpow.pop %v1638
  %v1640 = vadd.f32 %v1639, 1.0
  %v1641 = vrcp.pop %v1640
  %v1642 = vmul.f32 1.0, %v1641
  %v1644 = vrot.slane %v1636, 2
  %v1646 = vxor.u32 %v1644, 2147483648
  %v1647 = vmul.f32 %v1646, 1.442695
  %v1648 = vpow.pop %v1647
  %v1649 = vadd.f32 %v1648, 1.0
  %v1650 = vrcp.pop %v1649
  %v1651 = vmul.f32 1.0, %v1650
  %v1652 = vrot.slane %v1636, 4
  %v1654 = vtanh.pop %v1652
  %v1655 = vrot.slane %v1636, 6
  %v1657 = vxor.u32 %v1655, 2147483648
  %v1658 = vmul.f32 %v1657, 1.442695
  %v1659 = vpow.pop %v1658
  %v1660 = vadd.f32 %v1659, 1.0
  %v1661 = vrcp.pop %v1660
  %v1662 = vmul.f32 1.0, %v1661
  %v1663 = vmul.f32 %v1651, %v1527
  %v1664 = vmul.f32 %v1642, %v1654
  %v1665 = vadd.f32 %v1663, %v1664
  %v1666 = vtanh.pop %v1665
  %v1667 = vmul.f32 %v1662, %v1666
  %v1668 = vld [vmem:[%s3] sm:$0x1]
  %v1669 = vld [vmem:[%s3 + $0x1] sm:$0x1]
  %v1670 = vld [vmem:[%s3 + $0x2] sm:$0x1]
  %v1671 = vld [vmem:[%s3 + $0x3] sm:$0x1]
  %v1672 = vlaneseq
  %v1673 = vshrl.u32 %v1672, 7
  %v1674 = vsub.s32 0, %v1673
  %v1675 = vrot.slane %v1668, %v1674
  %v1676 = vmul.f32 %v1667, %v1675
  %v1677 = vlaneseq
  %v1678 = vshrl.u32 %v1677, 7
  %v1679 = vsub.s32 0, %v1678
  %v1680 = vrot.slane %v1669, %v1679
  %v1681 = vadd.f32 %v1676, %v1680
  %v1682 = vld [vmem:[%s4] sm:$0xff]
  %v1683 = vld [vmem:[%s4 + $0x8] sm:$0xff]
  %v1684 = vld [vmem:[%s4 + $0x10] sm:$0xff]
  %v1685 = vld [vmem:[%s4 + $0x18] sm:$0xff]
  %v1686 = vld [vmem:[%s4 + $0x20] sm:$0xff]
  %v1687 = vld [vmem:[%s4 + $0x28] sm:$0xff]
  %v1688 = vld [vmem:[%s4 + $0x30] sm:$0xff]
  %v1689 = vld [vmem:[%s4 + $0x38] sm:$0xff]
  %v1690 = vld [vmem:[%s4 + $0x40] sm:$0xff]
  %v1691 = vld [vmem:[%s4 + $0x48] sm:$0xff]
  %v1692 = vld [vmem:[%s4 + $0x50] sm:$0xff]
  %v1693 = vld [vmem:[%s4 + $0x58] sm:$0xff]
  %v1694 = vld [vmem:[%s4 + $0x60] sm:$0xff]
  %v1695 = vld [vmem:[%s4 + $0x68] sm:$0xff]
  %v1696 = vld [vmem:[%s4 + $0x70] sm:$0xff]
  %v1697 = vld [vmem:[%s4 + $0x78] sm:$0xff]
  %v1698 = vlaneseq
  %v1699 = vshrl.u32 %v1698, 7
  %v1700 = vsub.s32 0, %v1699
  %v1701 = vrot.slane %v1670, %v1700
  %1702 = vmatprep.subr.mxu0 0.0
  %1703 = vmatpush1.msra.mxu0 %v1697
  %1704 = vmatprep.subr.mxu0 0.0
  %1705 = vmatpush1.msra.mxu0 %v1696
  %1706 = vmatprep.subr.mxu0 0.0
  %1707 = vmatpush1.msra.mxu0 %v1695
  %1708 = vmatprep.subr.mxu0 0.0
  %1709 = vmatpush1.msra.mxu0 %v1694
  %1710 = vmatprep.subr.mxu0 0.0
  %1711 = vmatpush1.msra.mxu0 %v1693
  %1712 = vmatprep.subr.mxu0 0.0
  %1713 = vmatpush1.msra.mxu0 %v1692
  %1714 = vmatprep.subr.mxu0 0.0
  %1715 = vmatpush1.msra.mxu0 %v1691
  %1716 = vmatprep.subr.mxu0 0.0
  %1717 = vmatpush1.msra.mxu0 %v1690
  %1718 = vmatprep.subr.mxu0 0.0
  %1719 = vmatpush1.msra.mxu0 %v1689
  %1720 = vmatprep.subr.mxu0 0.0
  %1721 = vmatpush1.msra.mxu0 %v1688
  %1722 = vmatprep.subr.mxu0 0.0
  %1723 = vmatpush1.msra.mxu0 %v1687
  %1724 = vmatprep.subr.mxu0 0.0
  %1725 = vmatpush1.msra.mxu0 %v1686
  %1726 = vmatprep.subr.mxu0 0.0
  %1727 = vmatpush1.msra.mxu0 %v1685
  %1728 = vmatprep.subr.mxu0 0.0
  %1729 = vmatpush1.msra.mxu0 %v1684
  %1730 = vmatprep.subr.mxu0 0.0
  %1731 = vmatpush1.msra.mxu0 %v1683
  %1732 = vmatprep.subr.mxu0 0.0
  %1733 = vmatpush1.msra.mxu0 %v1682
  %1734 = vmatprep.subr.mxu0 0.0
  %1735 = vmatpush2.msra.mxu0 0.0
  %1736 = vmatprep.subr.mxu0 0.0
  %1737 = vmatpush2.msra.mxu0 0.0
  %1738 = vmatprep.subr.mxu0 0.0
  %1739 = vmatpush2.msra.mxu0 0.0
  %1740 = vmatprep.subr.mxu0 0.0
  %1741 = vmatpush2.msra.mxu0 0.0
  %1742 = vmatprep.subr.mxu0 0.0
  %1743 = vmatpush2.msra.mxu0 0.0
  %1744 = vmatprep.subr.mxu0 0.0
  %1745 = vmatpush2.msra.mxu0 0.0
  %1746 = vmatprep.subr.mxu0 0.0
  %1747 = vmatpush2.msra.mxu0 0.0
  %1748 = vmatprep.subr.mxu0 0.0
  %1749 = vmatpush2.msra.mxu0 0.0
  %1750 = vmatprep.subr.mxu0 0.0
  %1751 = vmatpush2.msra.mxu0 0.0
  %1752 = vmatprep.subr.mxu0 0.0
  %1753 = vmatpush2.msra.mxu0 0.0
  %1754 = vmatprep.subr.mxu0 0.0
  %1755 = vmatpush2.msra.mxu0 0.0
  %1756 = vmatprep.subr.mxu0 0.0
  %1757 = vmatpush2.msra.mxu0 0.0
  %1758 = vmatprep.subr.mxu0 0.0
  %1759 = vmatpush2.msra.mxu0 0.0
  %1760 = vmatprep.subr.mxu0 0.0
  %1761 = vmatpush2.msra.mxu0 0.0
  %1762 = vmatprep.subr.mxu0 0.0
  %1763 = vmatpush2.msra.mxu0 0.0
  %1764 = vmatprep.subr.mxu0 0.0
  %1765 = vmatpush2.msra.mxu0 0.0
  %1766 = vmatprep.mubr.f32.mxu0 0.0
  %1767 = vmatmul.mubr.f32.gmra.mxu0 %v1681
  %v1768 = vpop.f32.mrf.mxu0
  %v1769 = vadd.f32 %v1701, %v1768
  %v1770 = vpop.f32.mrf.mxu0
  %1771 = vdwg.mxu0
  %v1772 = vmax.f32 %v1769, 0.0
  %1773 = vmatprep.subr.mxu0 0.0
  %1774 = vmatpush1.xpose.msra.mxu0 0.0
  %1775 = vmatprep.subr.mxu0 0.0
  %1776 = vmatpush1.xpose.msra.mxu0 0.0
  %1777 = vmatprep.subr.mxu0 0.0
  %1778 = vmatpush1.xpose.msra.mxu0 0.0
  %1779 = vmatprep.subr.mxu0 0.0
  %1780 = vmatpush1.xpose.msra.mxu0 0.0
  %1781 = vmatprep.subr.mxu0 0.0
  %1782 = vmatpush1.xpose.msra.mxu0 0.0
  %1783 = vmatprep.subr.mxu0 0.0
  %1784 = vmatpush1.xpose.msra.mxu0 0.0
  %1785 = vmatprep.subr.mxu0 0.0
  %1786 = vmatpush1.xpose.msra.mxu0 0.0
  %1787 = vmatprep.subr.mxu0 0.0
  %1788 = vmatpush1.xpose.msra.mxu0 0.0
  %1789 = vmatprep.subr.mxu0 0.0
  %1790 = vmatpush1.xpose.msra.mxu0 0.0
  %1791 = vmatprep.subr.mxu0 0.0
  %1792 = vmatpush1.xpose.msra.mxu0 0.0
  %1793 = vmatprep.subr.mxu0 0.0
  %1794 = vmatpush1.xpose.msra.mxu0 0.0
  %1795 = vmatprep.subr.mxu0 0.0
  %1796 = vmatpush1.xpose.msra.mxu0 0.0
  %1797 = vmatprep.subr.mxu0 0.0
  %1798 = vmatpush1.xpose.msra.mxu0 0.0
  %1799 = vmatprep.subr.mxu0 0.0
  %1800 = vmatpush1.xpose.msra.mxu0 0.0
  %1801 = vmatprep.subr.mxu0 0.0
  %1802 = vmatpush1.xpose.msra.mxu0 0.0
  %1803 = vmatprep.subr.mxu0 0.0
  %1804 = vmatpush1.xpose.msra.mxu0 %v1772
  %1805 = vmatprep.subr.mxu0 0.0
  %1806 = vmatpush2.xpose.msra.mxu0 0.0
  %1807 = vmatprep.subr.mxu0 0.0
  %1808 = vmatpush2.xpose.msra.mxu0 0.0
  %1809 = vmatprep.subr.mxu0 0.0
  %1810 = vmatpush2.xpose.msra.mxu0 0.0
  %1811 = vmatprep.subr.mxu0 0.0
  %1812 = vmatpush2.xpose.msra.mxu0 0.0
  %1813 = vmatprep.subr.mxu0 0.0
  %1814 = vmatpush2.xpose.msra.mxu0 0.0
  %1815 = vmatprep.subr.mxu0 0.0
  %1816 = vmatpush2.xpose.msra.mxu0 0.0
  %1817 = vmatprep.subr.mxu0 0.0
  %1818 = vmatpush2.xpose.msra.mxu0 0.0
  %1819 = vmatprep.subr.mxu0 0.0
  %1820 = vmatpush2.xpose.msra.mxu0 0.0
  %1821 = vmatprep.subr.mxu0 0.0
  %1822 = vmatpush2.xpose.msra.mxu0 0.0
  %1823 = vmatprep.subr.mxu0 0.0
  %1824 = vmatpush2.xpose.msra.mxu0 0.0
  %1825 = vmatprep.subr.mxu0 0.0
  %1826 = vmatpush2.xpose.msra.mxu0 0.0
  %1827 = vmatprep.subr.mxu0 0.0
  %1828 = vmatpush2.xpose.msra.mxu0 0.0
  %1829 = vmatprep.subr.mxu0 0.0
  %1830 = vmatpush2.xpose.msra.mxu0 0.0
  %1831 = vmatprep.subr.mxu0 0.0
  %1832 = vmatpush2.xpose.msra.mxu0 0.0
  %1833 = vmatprep.subr.mxu0 0.0
  %1834 = vmatpush2.xpose.msra.mxu0 0.0
  %1835 = vmatprep.subr.mxu0 0.0
  %1836 = vmatpush2.xpose.msra.mxu0 0.0
  %1837 = vmatprep.mubr.f32.mxu0 0.0
  %1838 = vmatmul.mubr.f32.gmra.mxu0 %v1671
  %v1839 = vpop.f32.mrf.mxu0
  %v1840 = vadd.f32 0.0, %v1839
  %v1841 = vpop.f32.mrf.mxu0
  %1842 = vdwg.mxu0
  %vm1843 = vcmask 8192
  %1844 = vst.msk [vmem:[%s5] sm:$0x1] %vm1843, %v1840
  // Predicated region
  $region22: #{pair_lstm_classifier.1} parent=0 // pred_check
    _
  $region23: #{pair_lstm_classifier.1} parent=0 // pred_check_branch
    %1846 = sbr.rel (0) target = $region25
  $region24: #{pair_lstm_classifier.1} parent=0 // pred_region
    _
  $region25: #{pair_lstm_classifier.1} parent=0 // pred_fallthru
    _
  // Predicated region
  $region26: #{pair_lstm_classifier.1} parent=0 // pred_check
    _
  $region27: #{pair_lstm_classifier.1} parent=0 // pred_check_branch
    %1848 = sbr.rel (0) target = $region29
  $region28: #{pair_lstm_classifier.1} parent=0 // pred_region
    _
  $region29: #{pair_lstm_classifier.1} parent=0 // pred_fallthru
    _

</llo_original>
